<compile_context>
chip_gen: v7x
topology: tpu7x:2x2x1
jax: 0.10.0
libtpu: 0.0.40
codegen_flags: <defaults>
</compile_context>

<pallas_src>
import jax
import jax.numpy as jnp
from jax.experimental import pallas as pl
from jax.experimental.pallas import tpu as pltpu

# Small shapes consistent with the module's forward (original: embed=5379, UNITS=512).
EMBED = 64          # embed_size
UNITS = 32          # LSTM_UNITS  (power of two -> cheap direction lane-mask)
H2 = 2 * UNITS      # bidirectional hidden width (LSTM_UNITS * 2)
SEQ = 8             # b  (rows of x; fed to LSTM as batch=1, seq=b)

assert UNITS > 0 and (UNITS & (UNITS - 1)) == 0, "UNITS must be a power of two"

VMEM_SPEC = pl.BlockSpec(memory_space=pltpu.MemorySpace.VMEM)


# --------------------------- fully fused forward kernel -----------------------------
def _fused_kernel(x_ref, xrr_ref, win1_ref, win2_ref, wrec_ref, bin_ref,
                  wlin12_ref, blin12_ref, wrvrlc_ref, brvrlc_ref,
                  wpe_ref, wheads_ref, bph_ref,
                  oseq_ref, oheads_ref):
    # x_ref:      (T, F)        input sequence
    # xrr_ref:    (1, 2*H2)     [avgpool3d(x_rv) | avgpool3d(x_rlc)]
    # win1_ref:   (F, 8H)       lstm1 input weights, gate-major / direction-minor lanes
    # win2_ref:   (2H, 8H)      lstm2 input weights (same layout)
    # wrec_ref:   (2, 2H, 8H)   recurrent weights (block structure per direction)
    # bin_ref:    (2, 8H)       folded (b_ih + b_hh) biases for lstm1 / lstm2
    # wlin12_ref: (2*H2, 2*H2)  blockdiag(linear1, linear2)
    # wrvrlc_ref: (2*H2, 2*H2)  blockdiag(linear_rv, linear_rlc)
    # wpe_ref:    (H2, 1)       linear_pe
    # wheads_ref: (4*H2, 13)    [fc0(3) | fc2(4) | fc1(3,pad) | fc3(3,pad)]
    # bph_ref:    (1, 14)       [b_pe | b_fc0 | b_fc2 | b_fc1 | b_fc3]
    # oseq_ref:   (T, 1)        linear_pe(hidden)
    # oheads_ref: (1, 13)       all four global FC heads
    T = x_ref.shape[0]
    H = UNITS
    HH = 2 * H          # == H2, width of [fwd | bwd] hidden
    G8 = 8 * H          # 4 gates x 2 directions, lane-interleaved per gate
    f32 = jnp.float32
    bf16 = jnp.bfloat16

    lane = jax.lax.broadcasted_iota(jnp.int32, (1, G8), 1)
    g_mask = (lane >= 4 * H) & (lane < 6 * H)   # cell-candidate ("g") lanes -> tanh
    fwd_mask = (lane & H) == 0                  # forward-direction lanes (H is pow2)

    def bilstm(xs, win_ref_, b_in, wrec):
        # xs: (T, F) f32 value; b_in: (1, G8); wrec: (2H, G8)
        # Input projection for all timesteps and both directions: one bf16 MXU matmul.
        gin = jnp.dot(xs.astype(bf16), win_ref_[...].astype(bf16),
                      preferred_element_type=f32) + b_in             # (T, G8)
        wrec_bf = wrec.astype(bf16)                                  # hoisted cast

        h = jnp.zeros((1, HH), f32)   # [h_f | h_b]
        c = jnp.zeros((1, HH), f32)   # [c_f | c_b]
        rows = []
        # Static fully-unrolled recurrence; both directions share one MXU dot and one
        # EUP tanh per step.  (T=8 rows fit easily in vregs; use fori_loop + VMEM
        # scratch rows for larger T.)
        for s in range(T):
            rec = jnp.dot(h.astype(bf16), wrec_bf,
                          preferred_element_type=f32)                # (1, G8)
            # fwd lanes consume gin row s, bwd lanes consume gin row T-1-s
            g = jnp.where(fwd_mask, gin[s:s + 1, :], gin[T - 1 - s:T - s, :]) + rec
            # single EUP pass: sigmoid(x) = 0.5*tanh(0.5*x) + 0.5
            t = jnp.tanh(jnp.where(g_mask, g, 0.5 * g))
            a = jnp.where(g_mask, t, 0.5 * t + 0.5)                  # (1, G8)
            i_g, f_g = a[:, 0:HH], a[:, HH:2 * HH]
            c_g, o_g = a[:, 2 * HH:3 * HH], a[:, 3 * HH:4 * HH]
            c = f_g * c + i_g * c_g
            h = o_g * jnp.tanh(c)
            rows.append(h)            # row s = [h_fwd(s) | h_bwd(T-1-s)]

        hs = jnp.concatenate(rows, axis=0)          # (T, 2H)
        hs_rev = jnp.concatenate(rows[::-1], axis=0)
        lane_o = jax.lax.broadcasted_iota(jnp.int32, (T, HH), 1)
        # time-ordered PyTorch layout: row t = [h_fwd(t) | h_bwd(t)]
        return jnp.where(lane_o < H, hs, hs_rev)

    def swish(z):
        return z * jax.nn.sigmoid(z)

    x = x_ref[...]
    h1 = bilstm(x, win1_ref, bin_ref[0:1, :], wrec_ref[0, :, :])     # (T, H2)
    h2 = bilstm(h1, win2_ref, bin_ref[1:2, :], wrec_ref[1, :, :])    # (T, H2)

    # linear1 / linear2 packed block-diagonally: one matmul + one swish pass
    h12 = jnp.concatenate([h1, h2], axis=-1)                         # (T, 2*H2)
    z12 = jnp.dot(h12.astype(bf16), wlin12_ref[...].astype(bf16),
                  preferred_element_type=f32) + blin12_ref[...]
    sw12 = swish(z12)
    hidden = h1 + h2 + sw12[:, 0:HH] + sw12[:, HH:2 * HH]            # (T, H2)

    # linear_pe over the sequence (tiny N=1 dot, kept f32)
    bph = bph_ref[...]
    oseq_ref[...] = (jnp.dot(hidden, wpe_ref[...], preferred_element_type=f32)
                     + bph[:, 0:1])

    # AdaptiveAvgPool1d(1) over the sequence axis
    hidden2 = jnp.mean(hidden, axis=0, keepdims=True)                # (1, H2)

    # linear_rv / linear_rlc swish heads, packed block-diagonally
    xrr = xrr_ref[...]                                               # (1, 2*H2)
    zrr = (jnp.dot(xrr, wrvrlc_ref[...], preferred_element_type=f32)
           + brvrlc_ref[...])
    rr_sum = xrr + swish(zrr)           # [x_rv + x_rv1 | x_rlc + x_rlc1]

    # hidden_global = [hidden_rv | hidden_rlc] = [hidden2|rv_sum|hidden2|rlc_sum]
    hidden_global = jnp.concatenate(
        [hidden2, rr_sum[:, 0:HH], hidden2, rr_sum[:, HH:2 * HH]], axis=-1)  # (1, 4*H2)

    # all four global FC heads in one matmul
    oheads_ref[...] = (jnp.dot(hidden_global, wheads_ref[...],
                               preferred_element_type=f32) + bph[:, 1:14])


# ----------------------------------- parameters -------------------------------------
def init_raw_params(key):
    keys = iter(jax.random.split(key, 40))

    def w(shape, scale=0.05):
        return (scale * jax.random.normal(next(keys), shape)).astype(jnp.float32)

    H = UNITS
    G = 4 * H

    def lstm_raw(in_size):
        return {"wih_f": w((in_size, G)), "wih_b": w((in_size, G)),
                "whh_f": w((H, G)), "whh_b": w((H, G)),
                "b_f": w((1, G)), "b_b": w((1, G))}   # b_ih + b_hh folded

    return {
        "lstm1": lstm_raw(EMBED),
        "lstm2": lstm_raw(H2),
        "linear1_w": w((H2, H2)), "linear1_b": w((1, H2)),
        "linear2_w": w((H2, H2)), "linear2_b": w((1, H2)),
        "linear_rv_w": w((H2, H2)), "linear_rv_b": w((1, H2)),
        "linear_rlc_w": w((H2, H2)), "linear_rlc_b": w((1, H2)),
        "linear_pe_w": w((H2, 1)), "linear_pe_b": w((1, 1)),
        "fc0_w": w((4 * H2, 3)), "fc0_b": w((1, 3)),
        "fc1_w": w((2 * H2, 3)), "fc1_b": w((1, 3)),
        "fc2_w": w((4 * H2, 4)), "fc2_b": w((1, 4)),
        "fc3_w": w((2 * H2, 3)), "fc3_b": w((1, 3)),
    }


def pack_params(raw):
    """One-time re-layout of weights into the kernel's packed slabs."""
    H = UNITS

    def interleave_cols(a_f, a_b):
        # per-gate lane interleave: [i_f|i_b | f_f|f_b | g_f|g_b | o_f|o_b]
        cols = []
        for k in range(4):
            cols.append(a_f[:, k * H:(k + 1) * H])
            cols.append(a_b[:, k * H:(k + 1) * H])
        return jnp.concatenate(cols, axis=1)

    def lstm_pack(lr):
        w_in = interleave_cols(lr["wih_f"], lr["wih_b"])             # (in, 8H)
        b_in = interleave_cols(lr["b_f"], lr["b_b"])                 # (1, 8H)
        w_rec = jnp.concatenate([
            interleave_cols(lr["whh_f"], jnp.zeros_like(lr["whh_f"])),   # h_f rows
            interleave_cols(jnp.zeros_like(lr["whh_b"]), lr["whh_b"]),   # h_b rows
        ], axis=0)                                                   # (2H, 8H)
        return w_in, b_in, w_rec

    w_in1, b_in1, w_rec1 = lstm_pack(raw["lstm1"])
    w_in2, b_in2, w_rec2 = lstm_pack(raw["lstm2"])

    def blockdiag(a, b):
        z_ab = jnp.zeros((a.shape[0], b.shape[1]), jnp.float32)
        z_ba = jnp.zeros((b.shape[0], a.shape[1]), jnp.float32)
        return jnp.concatenate([jnp.concatenate([a, z_ab], axis=1),
                                jnp.concatenate([z_ba, b], axis=1)], axis=0)

    w_lin12 = blockdiag(raw["linear1_w"], raw["linear2_w"])
    b_lin12 = jnp.concatenate([raw["linear1_b"], raw["linear2_b"]], axis=1)
    w_rvrlc = blockdiag(raw["linear_rv_w"], raw["linear_rlc_w"])
    b_rvrlc = jnp.concatenate([raw["linear_rv_b"], raw["linear_rlc_b"]], axis=1)

    # global heads: all consume hidden_global (1, 4*H2); fc1/fc3 get zero block rows
    zeros_fc = jnp.zeros((2 * H2, 3), jnp.float32)
    fc1_full = jnp.concatenate([raw["fc1_w"], zeros_fc], axis=0)     # rows = hidden_rv
    fc3_full = jnp.concatenate([zeros_fc, raw["fc3_w"]], axis=0)     # rows = hidden_rlc
    w_heads = jnp.concatenate([raw["fc0_w"], raw["fc2_w"], fc1_full, fc3_full], axis=1)
    b_heads = jnp.concatenate([raw["fc0_b"], raw["fc2_b"],
                               raw["fc1_b"], raw["fc3_b"]], axis=1)  # (1, 13)
    b_ph = jnp.concatenate([raw["linear_pe_b"], b_heads], axis=1)    # (1, 14)

    return {
        "w_in1": w_in1, "w_in2": w_in2,
        "w_rec12": jnp.stack([w_rec1, w_rec2], axis=0),              # (2, 2H, 8H)
        "b_in12": jnp.concatenate([b_in1, b_in2], axis=0),           # (2, 8H)
        "w_lin12": w_lin12, "b_lin12": b_lin12,
        "w_rvrlc": w_rvrlc, "b_rvrlc": b_rvrlc,
        "w_pe": raw["linear_pe_w"], "w_heads": w_heads, "b_ph": b_ph,
    }


# ------------------------------------- forward --------------------------------------
@jax.jit
def neural_net_forward(params, x, x_rv, x_rlc):
    T = x.shape[0]

    # Dropout3d + GaussianNoise are identities in eval mode.
    # AdaptiveAvgPool3d(1): mean over (D, H, W), reshape(1, -1)
    x_rv_p = jnp.mean(x_rv, axis=(2, 3, 4)).reshape(1, -1)
    x_rlc_p = jnp.mean(x_rlc, axis=(2, 3, 4)).reshape(1, -1)
    xrr = jnp.concatenate([x_rv_p, x_rlc_p], axis=-1)                # (1, 2*H2)

    out_seq, heads = pl.pallas_call(
        _fused_kernel,
        out_shape=(jax.ShapeDtypeStruct((T, 1), jnp.float32),
                   jax.ShapeDtypeStruct((1, 13), jnp.float32)),
        in_specs=[VMEM_SPEC] * 13,
        out_specs=(VMEM_SPEC, VMEM_SPEC),
    )(x, xrr,
      params["w_in1"], params["w_in2"], params["w_rec12"], params["b_in12"],
      params["w_lin12"], params["b_lin12"],
      params["w_rvrlc"], params["b_rvrlc"],
      params["w_pe"], params["w_heads"], params["b_ph"])

    output = out_seq.reshape(1, T, 1)
    og0 = heads[:, 0:3]
    og2 = heads[:, 3:7]
    og1 = heads[:, 7:10]
    og3 = heads[:, 10:13]
    return output, og0, og1, og2, og3


# --------------------------- pure-JAX reference (correctness) -----------------------
def _reference_forward(raw, x, x_rv, x_rlc):
    H = UNITS

    def swish(z):
        return z * jax.nn.sigmoid(z)

    def lstm_dir(xs, wih, whh, b):
        h = jnp.zeros((1, H), jnp.float32)
        c = jnp.zeros((1, H), jnp.float32)
        outs = []
        for t in range(xs.shape[0]):
            g = xs[t:t + 1] @ wih + h @ whh + b
            i = jax.nn.sigmoid(g[:, 0:H])
            f = jax.nn.sigmoid(g[:, H:2 * H])
            gg = jnp.tanh(g[:, 2 * H:3 * H])
            o = jax.nn.sigmoid(g[:, 3 * H:4 * H])
            c = f * c + i * gg
            h = o * jnp.tanh(c)
            outs.append(h)
        return jnp.concatenate(outs, axis=0)

    def bilstm_ref(xs, lr):
        hf = lstm_dir(xs, lr["wih_f"], lr["whh_f"], lr["b_f"])
        hb = lstm_dir(xs[::-1], lr["wih_b"], lr["whh_b"], lr["b_b"])[::-1]
        return jnp.concatenate([hf, hb], axis=-1)

    xrv = jnp.mean(x_rv, axis=(2, 3, 4)).reshape(1, -1)
    xrlc = jnp.mean(x_rlc, axis=(2, 3, 4)).reshape(1, -1)
    xrv1 = swish(xrv @ raw["linear_rv_w"] + raw["linear_rv_b"])
    xrlc1 = swish(xrlc @ raw["linear_rlc_w"] + raw["linear_rlc_b"])
    h1 = bilstm_ref(x, raw["lstm1"])
    h2 = bilstm_ref(h1, raw["lstm2"])
    hc1 = swish(h1 @ raw["linear1_w"] + raw["linear1_b"])
    hc2 = swish(h2 @ raw["linear2_w"] + raw["linear2_b"])
    hidden = h1 + h2 + hc1 + hc2
    output = (hidden @ raw["linear_pe_w"] + raw["linear_pe_b"]).reshape(1, -1, 1)
    hidden2 = jnp.mean(hidden, axis=0, keepdims=True)
    hidden_rv = jnp.concatenate([hidden2, xrv + xrv1], axis=-1)
    hidden_rlc = jnp.concatenate([hidden2, xrlc + xrlc1], axis=-1)
    hidden_global = jnp.concatenate([hidden_rv, hidden_rlc], axis=-1)
    og0 = hidden_global @ raw["fc0_w"] + raw["fc0_b"]
    og1 = hidden_rv @ raw["fc1_w"] + raw["fc1_b"]
    og2 = hidden_global @ raw["fc2_w"] + raw["fc2_b"]
    og3 = hidden_rlc @ raw["fc3_w"] + raw["fc3_b"]
    return output, og0, og1, og2, og3


if __name__ == "__main__":
    key = jax.random.PRNGKey(0)
    kp, kx, krv, krlc = jax.random.split(key, 4)
    raw = init_raw_params(kp)
    params = pack_params(raw)

    x = jax.random.normal(kx, (SEQ, EMBED), dtype=jnp.float32)            # (b, f)
    x_rv = jax.random.normal(krv, (1, H2, 2, 2, 2), dtype=jnp.float32)    # NCDHW
    x_rlc = jax.random.normal(krlc, (1, H2, 2, 2, 2), dtype=jnp.float32)  # NCDHW

    outs = neural_net_forward(params, x, x_rv, x_rlc)
    outs = jax.block_until_ready(outs)

    expected_shapes = [(1, SEQ, 1), (1, 3), (1, 3), (1, 4), (1, 3)]
    assert [tuple(o.shape) for o in outs] == expected_shapes
    assert all(bool(jnp.all(jnp.isfinite(o))) for o in outs)

    refs = _reference_forward(raw, x, x_rv, x_rlc)
    for o, r in zip(outs, refs):
        max_err = float(jnp.max(jnp.abs(o - r)))
        assert max_err < 1e-2, f"mismatch vs reference: {max_err}"

    print("KERNEL_OK")
</pallas_src>

<mosaic_0001>
module attributes {stable_mosaic.version = 11 : i64} {
  func.func @_fused_kernel(%arg0: memref<8x64xf32, #tpu.memory_space<vmem>>, %arg1: memref<1x128xf32, #tpu.memory_space<vmem>>, %arg2: memref<64x256xf32, #tpu.memory_space<vmem>>, %arg3: memref<64x256xf32, #tpu.memory_space<vmem>>, %arg4: memref<2x64x256xf32, #tpu.memory_space<vmem>>, %arg5: memref<2x256xf32, #tpu.memory_space<vmem>>, %arg6: memref<128x128xf32, #tpu.memory_space<vmem>>, %arg7: memref<1x128xf32, #tpu.memory_space<vmem>>, %arg8: memref<128x128xf32, #tpu.memory_space<vmem>>, %arg9: memref<1x128xf32, #tpu.memory_space<vmem>>, %arg10: memref<64x1xf32, #tpu.memory_space<vmem>>, %arg11: memref<256x13xf32, #tpu.memory_space<vmem>>, %arg12: memref<1x14xf32, #tpu.memory_space<vmem>>, %arg13: memref<8x1xf32, #tpu.memory_space<vmem>>, %arg14: memref<1x13xf32, #tpu.memory_space<vmem>>) attributes {dimension_semantics = [], scalar_prefetch = 0 : i64, scratch_operands = 0 : i64, tpu.core_type = #tpu.core_type<tc>} {
    %0 = tpu.iota {dimensions = array<i32: 1>} : vector<1x256xi32>
    %c128_i32 = arith.constant 128 : i32
    %1 = vector.broadcast %c128_i32 : i32 to vector<1x256xi32>
    %2 = arith.cmpi sge, %0, %1 : vector<1x256xi32>
    %c192_i32 = arith.constant 192 : i32
    %3 = vector.broadcast %c192_i32 : i32 to vector<1x256xi32>
    %4 = arith.cmpi slt, %0, %3 : vector<1x256xi32>
    %5 = arith.andi %2, %4 : vector<1x256xi1>
    %c32_i32 = arith.constant 32 : i32
    %6 = vector.broadcast %c32_i32 : i32 to vector<1x256xi32>
    %7 = arith.andi %0, %6 : vector<1x256xi32>
    %c0_i32 = arith.constant 0 : i32
    %8 = vector.broadcast %c0_i32 : i32 to vector<1x256xi32>
    %9 = arith.cmpi eq, %7, %8 : vector<1x256xi32>
    %c0 = arith.constant 0 : index
    %c0_0 = arith.constant 0 : index
    %10 = vector.load %arg0[%c0, %c0_0] : memref<8x64xf32, #tpu.memory_space<vmem>>, vector<8x64xf32>
    %c0_1 = arith.constant 0 : index
    %c0_2 = arith.constant 0 : index
    %11 = vector.load %arg5[%c0_1, %c0_2] : memref<2x256xf32, #tpu.memory_space<vmem>>, vector<1x256xf32>
    %c0_3 = arith.constant 0 : index
    %c0_4 = arith.constant 0 : index
    %c0_5 = arith.constant 0 : index
    %12 = vector.load %arg4[%c0_3, %c0_4, %c0_5] : memref<2x64x256xf32, #tpu.memory_space<vmem>>, vector<1x64x256xf32>
    %13 = vector.shape_cast %12 : vector<1x64x256xf32> to vector<64x256xf32>
    %14 = arith.truncf %10 : vector<8x64xf32> to vector<8x64xbf16>
    %c0_6 = arith.constant 0 : index
    %c0_7 = arith.constant 0 : index
    %15 = vector.load %arg2[%c0_6, %c0_7] : memref<64x256xf32, #tpu.memory_space<vmem>>, vector<64x256xf32>
    %16 = arith.truncf %15 : vector<64x256xf32> to vector<64x256xbf16>
    %cst = arith.constant dense<0.000000e+00> : vector<8x256xf32>
    %17 = tpu.matmul %14, %16, %cst {dimension_numbers = #tpu.dot_dimension_numbers<[1], [0], [0], [1], [0, 0, 1, 1], [], []>} : vector<8x64xbf16>, vector<64x256xbf16>, vector<8x256xf32> -> vector<8x256xf32>
    %18 = vector.broadcast %11 : vector<1x256xf32> to vector<8x256xf32>
    %19 = arith.addf %17, %18 : vector<8x256xf32>
    %20 = arith.truncf %13 : vector<64x256xf32> to vector<64x256xbf16>
    %cst_8 = arith.constant 0.000000e+00 : f32
    %21 = vector.broadcast %cst_8 : f32 to vector<1x64xf32>
    %cst_9 = arith.constant 0.000000e+00 : f32
    %22 = vector.broadcast %cst_9 : f32 to vector<1x64xf32>
    %23 = arith.truncf %21 : vector<1x64xf32> to vector<1x64xbf16>
    %cst_10 = arith.constant dense<0.000000e+00> : vector<1x256xf32>
    %24 = tpu.matmul %23, %20, %cst_10 {dimension_numbers = #tpu.dot_dimension_numbers<[1], [0], [0], [1], [0, 0, 1, 1], [], []>} : vector<1x64xbf16>, vector<64x256xbf16>, vector<1x256xf32> -> vector<1x256xf32>
    %25 = vector.extract_strided_slice %19 {offsets = [0, 0], sizes = [1, 256], strides = [1, 1]} : vector<8x256xf32> to vector<1x256xf32>
    %26 = vector.extract_strided_slice %19 {offsets = [7, 0], sizes = [1, 256], strides = [1, 1]} : vector<8x256xf32> to vector<1x256xf32>
    %27 = arith.select %9, %25, %26 : vector<1x256xi1>, vector<1x256xf32>
    %28 = arith.addf %27, %24 : vector<1x256xf32>
    %cst_11 = arith.constant 5.000000e-01 : f32
    %29 = vector.broadcast %cst_11 : f32 to vector<1x256xf32>
    %30 = arith.mulf %29, %28 : vector<1x256xf32>
    %31 = arith.select %5, %28, %30 : vector<1x256xi1>, vector<1x256xf32>
    %32 = math.tanh %31 : vector<1x256xf32>
    %cst_12 = arith.constant 5.000000e-01 : f32
    %33 = vector.broadcast %cst_12 : f32 to vector<1x256xf32>
    %34 = arith.mulf %33, %32 : vector<1x256xf32>
    %cst_13 = arith.constant 5.000000e-01 : f32
    %35 = vector.broadcast %cst_13 : f32 to vector<1x256xf32>
    %36 = arith.addf %34, %35 : vector<1x256xf32>
    %37 = arith.select %5, %32, %36 : vector<1x256xi1>, vector<1x256xf32>
    %38 = vector.extract_strided_slice %37 {offsets = [0, 0], sizes = [1, 64], strides = [1, 1]} : vector<1x256xf32> to vector<1x64xf32>
    %39 = vector.extract_strided_slice %37 {offsets = [0, 64], sizes = [1, 64], strides = [1, 1]} : vector<1x256xf32> to vector<1x64xf32>
    %40 = vector.extract_strided_slice %37 {offsets = [0, 128], sizes = [1, 64], strides = [1, 1]} : vector<1x256xf32> to vector<1x64xf32>
    %41 = vector.extract_strided_slice %37 {offsets = [0, 192], sizes = [1, 64], strides = [1, 1]} : vector<1x256xf32> to vector<1x64xf32>
    %42 = arith.mulf %39, %22 : vector<1x64xf32>
    %43 = arith.mulf %38, %40 : vector<1x64xf32>
    %44 = arith.addf %42, %43 : vector<1x64xf32>
    %45 = math.tanh %44 : vector<1x64xf32>
    %46 = arith.mulf %41, %45 : vector<1x64xf32>
    %47 = arith.truncf %46 : vector<1x64xf32> to vector<1x64xbf16>
    %cst_14 = arith.constant dense<0.000000e+00> : vector<1x256xf32>
    %48 = tpu.matmul %47, %20, %cst_14 {dimension_numbers = #tpu.dot_dimension_numbers<[1], [0], [0], [1], [0, 0, 1, 1], [], []>} : vector<1x64xbf16>, vector<64x256xbf16>, vector<1x256xf32> -> vector<1x256xf32>
    %49 = vector.extract_strided_slice %19 {offsets = [1, 0], sizes = [1, 256], strides = [1, 1]} : vector<8x256xf32> to vector<1x256xf32>
    %50 = vector.extract_strided_slice %19 {offsets = [6, 0], sizes = [1, 256], strides = [1, 1]} : vector<8x256xf32> to vector<1x256xf32>
    %51 = arith.select %9, %49, %50 : vector<1x256xi1>, vector<1x256xf32>
    %52 = arith.addf %51, %48 : vector<1x256xf32>
    %cst_15 = arith.constant 5.000000e-01 : f32
    %53 = vector.broadcast %cst_15 : f32 to vector<1x256xf32>
    %54 = arith.mulf %53, %52 : vector<1x256xf32>
    %55 = arith.select %5, %52, %54 : vector<1x256xi1>, vector<1x256xf32>
    %56 = math.tanh %55 : vector<1x256xf32>
    %cst_16 = arith.constant 5.000000e-01 : f32
    %57 = vector.broadcast %cst_16 : f32 to vector<1x256xf32>
    %58 = arith.mulf %57, %56 : vector<1x256xf32>
    %cst_17 = arith.constant 5.000000e-01 : f32
    %59 = vector.broadcast %cst_17 : f32 to vector<1x256xf32>
    %60 = arith.addf %58, %59 : vector<1x256xf32>
    %61 = arith.select %5, %56, %60 : vector<1x256xi1>, vector<1x256xf32>
    %62 = vector.extract_strided_slice %61 {offsets = [0, 0], sizes = [1, 64], strides = [1, 1]} : vector<1x256xf32> to vector<1x64xf32>
    %63 = vector.extract_strided_slice %61 {offsets = [0, 64], sizes = [1, 64], strides = [1, 1]} : vector<1x256xf32> to vector<1x64xf32>
    %64 = vector.extract_strided_slice %61 {offsets = [0, 128], sizes = [1, 64], strides = [1, 1]} : vector<1x256xf32> to vector<1x64xf32>
    %65 = vector.extract_strided_slice %61 {offsets = [0, 192], sizes = [1, 64], strides = [1, 1]} : vector<1x256xf32> to vector<1x64xf32>
    %66 = arith.mulf %63, %44 : vector<1x64xf32>
    %67 = arith.mulf %62, %64 : vector<1x64xf32>
    %68 = arith.addf %66, %67 : vector<1x64xf32>
    %69 = math.tanh %68 : vector<1x64xf32>
    %70 = arith.mulf %65, %69 : vector<1x64xf32>
    %71 = arith.truncf %70 : vector<1x64xf32> to vector<1x64xbf16>
    %cst_18 = arith.constant dense<0.000000e+00> : vector<1x256xf32>
    %72 = tpu.matmul %71, %20, %cst_18 {dimension_numbers = #tpu.dot_dimension_numbers<[1], [0], [0], [1], [0, 0, 1, 1], [], []>} : vector<1x64xbf16>, vector<64x256xbf16>, vector<1x256xf32> -> vector<1x256xf32>
    %73 = vector.extract_strided_slice %19 {offsets = [2, 0], sizes = [1, 256], strides = [1, 1]} : vector<8x256xf32> to vector<1x256xf32>
    %74 = vector.extract_strided_slice %19 {offsets = [5, 0], sizes = [1, 256], strides = [1, 1]} : vector<8x256xf32> to vector<1x256xf32>
    %75 = arith.select %9, %73, %74 : vector<1x256xi1>, vector<1x256xf32>
    %76 = arith.addf %75, %72 : vector<1x256xf32>
    %cst_19 = arith.constant 5.000000e-01 : f32
    %77 = vector.broadcast %cst_19 : f32 to vector<1x256xf32>
    %78 = arith.mulf %77, %76 : vector<1x256xf32>
    %79 = arith.select %5, %76, %78 : vector<1x256xi1>, vector<1x256xf32>
    %80 = math.tanh %79 : vector<1x256xf32>
    %cst_20 = arith.constant 5.000000e-01 : f32
    %81 = vector.broadcast %cst_20 : f32 to vector<1x256xf32>
    %82 = arith.mulf %81, %80 : vector<1x256xf32>
    %cst_21 = arith.constant 5.000000e-01 : f32
    %83 = vector.broadcast %cst_21 : f32 to vector<1x256xf32>
    %84 = arith.addf %82, %83 : vector<1x256xf32>
    %85 = arith.select %5, %80, %84 : vector<1x256xi1>, vector<1x256xf32>
    %86 = vector.extract_strided_slice %85 {offsets = [0, 0], sizes = [1, 64], strides = [1, 1]} : vector<1x256xf32> to vector<1x64xf32>
    %87 = vector.extract_strided_slice %85 {offsets = [0, 64], sizes = [1, 64], strides = [1, 1]} : vector<1x256xf32> to vector<1x64xf32>
    %88 = vector.extract_strided_slice %85 {offsets = [0, 128], sizes = [1, 64], strides = [1, 1]} : vector<1x256xf32> to vector<1x64xf32>
    %89 = vector.extract_strided_slice %85 {offsets = [0, 192], sizes = [1, 64], strides = [1, 1]} : vector<1x256xf32> to vector<1x64xf32>
    %90 = arith.mulf %87, %68 : vector<1x64xf32>
    %91 = arith.mulf %86, %88 : vector<1x64xf32>
    %92 = arith.addf %90, %91 : vector<1x64xf32>
    %93 = math.tanh %92 : vector<1x64xf32>
    %94 = arith.mulf %89, %93 : vector<1x64xf32>
    %95 = arith.truncf %94 : vector<1x64xf32> to vector<1x64xbf16>
    %cst_22 = arith.constant dense<0.000000e+00> : vector<1x256xf32>
    %96 = tpu.matmul %95, %20, %cst_22 {dimension_numbers = #tpu.dot_dimension_numbers<[1], [0], [0], [1], [0, 0, 1, 1], [], []>} : vector<1x64xbf16>, vector<64x256xbf16>, vector<1x256xf32> -> vector<1x256xf32>
    %97 = vector.extract_strided_slice %19 {offsets = [3, 0], sizes = [1, 256], strides = [1, 1]} : vector<8x256xf32> to vector<1x256xf32>
    %98 = vector.extract_strided_slice %19 {offsets = [4, 0], sizes = [1, 256], strides = [1, 1]} : vector<8x256xf32> to vector<1x256xf32>
    %99 = arith.select %9, %97, %98 : vector<1x256xi1>, vector<1x256xf32>
    %100 = arith.addf %99, %96 : vector<1x256xf32>
    %cst_23 = arith.constant 5.000000e-01 : f32
    %101 = vector.broadcast %cst_23 : f32 to vector<1x256xf32>
    %102 = arith.mulf %101, %100 : vector<1x256xf32>
    %103 = arith.select %5, %100, %102 : vector<1x256xi1>, vector<1x256xf32>
    %104 = math.tanh %103 : vector<1x256xf32>
    %cst_24 = arith.constant 5.000000e-01 : f32
    %105 = vector.broadcast %cst_24 : f32 to vector<1x256xf32>
    %106 = arith.mulf %105, %104 : vector<1x256xf32>
    %cst_25 = arith.constant 5.000000e-01 : f32
    %107 = vector.broadcast %cst_25 : f32 to vector<1x256xf32>
    %108 = arith.addf %106, %107 : vector<1x256xf32>
    %109 = arith.select %5, %104, %108 : vector<1x256xi1>, vector<1x256xf32>
    %110 = vector.extract_strided_slice %109 {offsets = [0, 0], sizes = [1, 64], strides = [1, 1]} : vector<1x256xf32> to vector<1x64xf32>
    %111 = vector.extract_strided_slice %109 {offsets = [0, 64], sizes = [1, 64], strides = [1, 1]} : vector<1x256xf32> to vector<1x64xf32>
    %112 = vector.extract_strided_slice %109 {offsets = [0, 128], sizes = [1, 64], strides = [1, 1]} : vector<1x256xf32> to vector<1x64xf32>
    %113 = vector.extract_strided_slice %109 {offsets = [0, 192], sizes = [1, 64], strides = [1, 1]} : vector<1x256xf32> to vector<1x64xf32>
    %114 = arith.mulf %111, %92 : vector<1x64xf32>
    %115 = arith.mulf %110, %112 : vector<1x64xf32>
    %116 = arith.addf %114, %115 : vector<1x64xf32>
    %117 = math.tanh %116 : vector<1x64xf32>
    %118 = arith.mulf %113, %117 : vector<1x64xf32>
    %119 = arith.truncf %118 : vector<1x64xf32> to vector<1x64xbf16>
    %cst_26 = arith.constant dense<0.000000e+00> : vector<1x256xf32>
    %120 = tpu.matmul %119, %20, %cst_26 {dimension_numbers = #tpu.dot_dimension_numbers<[1], [0], [0], [1], [0, 0, 1, 1], [], []>} : vector<1x64xbf16>, vector<64x256xbf16>, vector<1x256xf32> -> vector<1x256xf32>
    %121 = vector.extract_strided_slice %19 {offsets = [4, 0], sizes = [1, 256], strides = [1, 1]} : vector<8x256xf32> to vector<1x256xf32>
    %122 = vector.extract_strided_slice %19 {offsets = [3, 0], sizes = [1, 256], strides = [1, 1]} : vector<8x256xf32> to vector<1x256xf32>
    %123 = arith.select %9, %121, %122 : vector<1x256xi1>, vector<1x256xf32>
    %124 = arith.addf %123, %120 : vector<1x256xf32>
    %cst_27 = arith.constant 5.000000e-01 : f32
    %125 = vector.broadcast %cst_27 : f32 to vector<1x256xf32>
    %126 = arith.mulf %125, %124 : vector<1x256xf32>
    %127 = arith.select %5, %124, %126 : vector<1x256xi1>, vector<1x256xf32>
    %128 = math.tanh %127 : vector<1x256xf32>
    %cst_28 = arith.constant 5.000000e-01 : f32
    %129 = vector.broadcast %cst_28 : f32 to vector<1x256xf32>
    %130 = arith.mulf %129, %128 : vector<1x256xf32>
    %cst_29 = arith.constant 5.000000e-01 : f32
    %131 = vector.broadcast %cst_29 : f32 to vector<1x256xf32>
    %132 = arith.addf %130, %131 : vector<1x256xf32>
    %133 = arith.select %5, %128, %132 : vector<1x256xi1>, vector<1x256xf32>
    %134 = vector.extract_strided_slice %133 {offsets = [0, 0], sizes = [1, 64], strides = [1, 1]} : vector<1x256xf32> to vector<1x64xf32>
    %135 = vector.extract_strided_slice %133 {offsets = [0, 64], sizes = [1, 64], strides = [1, 1]} : vector<1x256xf32> to vector<1x64xf32>
    %136 = vector.extract_strided_slice %133 {offsets = [0, 128], sizes = [1, 64], strides = [1, 1]} : vector<1x256xf32> to vector<1x64xf32>
    %137 = vector.extract_strided_slice %133 {offsets = [0, 192], sizes = [1, 64], strides = [1, 1]} : vector<1x256xf32> to vector<1x64xf32>
    %138 = arith.mulf %135, %116 : vector<1x64xf32>
    %139 = arith.mulf %134, %136 : vector<1x64xf32>
    %140 = arith.addf %138, %139 : vector<1x64xf32>
    %141 = math.tanh %140 : vector<1x64xf32>
    %142 = arith.mulf %137, %141 : vector<1x64xf32>
    %143 = arith.truncf %142 : vector<1x64xf32> to vector<1x64xbf16>
    %cst_30 = arith.constant dense<0.000000e+00> : vector<1x256xf32>
    %144 = tpu.matmul %143, %20, %cst_30 {dimension_numbers = #tpu.dot_dimension_numbers<[1], [0], [0], [1], [0, 0, 1, 1], [], []>} : vector<1x64xbf16>, vector<64x256xbf16>, vector<1x256xf32> -> vector<1x256xf32>
    %145 = vector.extract_strided_slice %19 {offsets = [5, 0], sizes = [1, 256], strides = [1, 1]} : vector<8x256xf32> to vector<1x256xf32>
    %146 = vector.extract_strided_slice %19 {offsets = [2, 0], sizes = [1, 256], strides = [1, 1]} : vector<8x256xf32> to vector<1x256xf32>
    %147 = arith.select %9, %145, %146 : vector<1x256xi1>, vector<1x256xf32>
    %148 = arith.addf %147, %144 : vector<1x256xf32>
    %cst_31 = arith.constant 5.000000e-01 : f32
    %149 = vector.broadcast %cst_31 : f32 to vector<1x256xf32>
    %150 = arith.mulf %149, %148 : vector<1x256xf32>
    %151 = arith.select %5, %148, %150 : vector<1x256xi1>, vector<1x256xf32>
    %152 = math.tanh %151 : vector<1x256xf32>
    %cst_32 = arith.constant 5.000000e-01 : f32
    %153 = vector.broadcast %cst_32 : f32 to vector<1x256xf32>
    %154 = arith.mulf %153, %152 : vector<1x256xf32>
    %cst_33 = arith.constant 5.000000e-01 : f32
    %155 = vector.broadcast %cst_33 : f32 to vector<1x256xf32>
    %156 = arith.addf %154, %155 : vector<1x256xf32>
    %157 = arith.select %5, %152, %156 : vector<1x256xi1>, vector<1x256xf32>
    %158 = vector.extract_strided_slice %157 {offsets = [0, 0], sizes = [1, 64], strides = [1, 1]} : vector<1x256xf32> to vector<1x64xf32>
    %159 = vector.extract_strided_slice %157 {offsets = [0, 64], sizes = [1, 64], strides = [1, 1]} : vector<1x256xf32> to vector<1x64xf32>
    %160 = vector.extract_strided_slice %157 {offsets = [0, 128], sizes = [1, 64], strides = [1, 1]} : vector<1x256xf32> to vector<1x64xf32>
    %161 = vector.extract_strided_slice %157 {offsets = [0, 192], sizes = [1, 64], strides = [1, 1]} : vector<1x256xf32> to vector<1x64xf32>
    %162 = arith.mulf %159, %140 : vector<1x64xf32>
    %163 = arith.mulf %158, %160 : vector<1x64xf32>
    %164 = arith.addf %162, %163 : vector<1x64xf32>
    %165 = math.tanh %164 : vector<1x64xf32>
    %166 = arith.mulf %161, %165 : vector<1x64xf32>
    %167 = arith.truncf %166 : vector<1x64xf32> to vector<1x64xbf16>
    %cst_34 = arith.constant dense<0.000000e+00> : vector<1x256xf32>
    %168 = tpu.matmul %167, %20, %cst_34 {dimension_numbers = #tpu.dot_dimension_numbers<[1], [0], [0], [1], [0, 0, 1, 1], [], []>} : vector<1x64xbf16>, vector<64x256xbf16>, vector<1x256xf32> -> vector<1x256xf32>
    %169 = vector.extract_strided_slice %19 {offsets = [6, 0], sizes = [1, 256], strides = [1, 1]} : vector<8x256xf32> to vector<1x256xf32>
    %170 = vector.extract_strided_slice %19 {offsets = [1, 0], sizes = [1, 256], strides = [1, 1]} : vector<8x256xf32> to vector<1x256xf32>
    %171 = arith.select %9, %169, %170 : vector<1x256xi1>, vector<1x256xf32>
    %172 = arith.addf %171, %168 : vector<1x256xf32>
    %cst_35 = arith.constant 5.000000e-01 : f32
    %173 = vector.broadcast %cst_35 : f32 to vector<1x256xf32>
    %174 = arith.mulf %173, %172 : vector<1x256xf32>
    %175 = arith.select %5, %172, %174 : vector<1x256xi1>, vector<1x256xf32>
    %176 = math.tanh %175 : vector<1x256xf32>
    %cst_36 = arith.constant 5.000000e-01 : f32
    %177 = vector.broadcast %cst_36 : f32 to vector<1x256xf32>
    %178 = arith.mulf %177, %176 : vector<1x256xf32>
    %cst_37 = arith.constant 5.000000e-01 : f32
    %179 = vector.broadcast %cst_37 : f32 to vector<1x256xf32>
    %180 = arith.addf %178, %179 : vector<1x256xf32>
    %181 = arith.select %5, %176, %180 : vector<1x256xi1>, vector<1x256xf32>
    %182 = vector.extract_strided_slice %181 {offsets = [0, 0], sizes = [1, 64], strides = [1, 1]} : vector<1x256xf32> to vector<1x64xf32>
    %183 = vector.extract_strided_slice %181 {offsets = [0, 64], sizes = [1, 64], strides = [1, 1]} : vector<1x256xf32> to vector<1x64xf32>
    %184 = vector.extract_strided_slice %181 {offsets = [0, 128], sizes = [1, 64], strides = [1, 1]} : vector<1x256xf32> to vector<1x64xf32>
    %185 = vector.extract_strided_slice %181 {offsets = [0, 192], sizes = [1, 64], strides = [1, 1]} : vector<1x256xf32> to vector<1x64xf32>
    %186 = arith.mulf %183, %164 : vector<1x64xf32>
    %187 = arith.mulf %182, %184 : vector<1x64xf32>
    %188 = arith.addf %186, %187 : vector<1x64xf32>
    %189 = math.tanh %188 : vector<1x64xf32>
    %190 = arith.mulf %185, %189 : vector<1x64xf32>
    %191 = arith.truncf %190 : vector<1x64xf32> to vector<1x64xbf16>
    %cst_38 = arith.constant dense<0.000000e+00> : vector<1x256xf32>
    %192 = tpu.matmul %191, %20, %cst_38 {dimension_numbers = #tpu.dot_dimension_numbers<[1], [0], [0], [1], [0, 0, 1, 1], [], []>} : vector<1x64xbf16>, vector<64x256xbf16>, vector<1x256xf32> -> vector<1x256xf32>
    %193 = vector.extract_strided_slice %19 {offsets = [7, 0], sizes = [1, 256], strides = [1, 1]} : vector<8x256xf32> to vector<1x256xf32>
    %194 = vector.extract_strided_slice %19 {offsets = [0, 0], sizes = [1, 256], strides = [1, 1]} : vector<8x256xf32> to vector<1x256xf32>
    %195 = arith.select %9, %193, %194 : vector<1x256xi1>, vector<1x256xf32>
    %196 = arith.addf %195, %192 : vector<1x256xf32>
    %cst_39 = arith.constant 5.000000e-01 : f32
    %197 = vector.broadcast %cst_39 : f32 to vector<1x256xf32>
    %198 = arith.mulf %197, %196 : vector<1x256xf32>
    %199 = arith.select %5, %196, %198 : vector<1x256xi1>, vector<1x256xf32>
    %200 = math.tanh %199 : vector<1x256xf32>
    %cst_40 = arith.constant 5.000000e-01 : f32
    %201 = vector.broadcast %cst_40 : f32 to vector<1x256xf32>
    %202 = arith.mulf %201, %200 : vector<1x256xf32>
    %cst_41 = arith.constant 5.000000e-01 : f32
    %203 = vector.broadcast %cst_41 : f32 to vector<1x256xf32>
    %204 = arith.addf %202, %203 : vector<1x256xf32>
    %205 = arith.select %5, %200, %204 : vector<1x256xi1>, vector<1x256xf32>
    %206 = vector.extract_strided_slice %205 {offsets = [0, 0], sizes = [1, 64], strides = [1, 1]} : vector<1x256xf32> to vector<1x64xf32>
    %207 = vector.extract_strided_slice %205 {offsets = [0, 64], sizes = [1, 64], strides = [1, 1]} : vector<1x256xf32> to vector<1x64xf32>
    %208 = vector.extract_strided_slice %205 {offsets = [0, 128], sizes = [1, 64], strides = [1, 1]} : vector<1x256xf32> to vector<1x64xf32>
    %209 = vector.extract_strided_slice %205 {offsets = [0, 192], sizes = [1, 64], strides = [1, 1]} : vector<1x256xf32> to vector<1x64xf32>
    %210 = arith.mulf %207, %188 : vector<1x64xf32>
    %211 = arith.mulf %206, %208 : vector<1x64xf32>
    %212 = arith.addf %210, %211 : vector<1x64xf32>
    %213 = math.tanh %212 : vector<1x64xf32>
    %214 = arith.mulf %209, %213 : vector<1x64xf32>
    %215 = tpu.concatenate %46, %70, %94, %118, %142, %166, %190, %214 in 0 : vector<1x64xf32>, vector<1x64xf32>, vector<1x64xf32>, vector<1x64xf32>, vector<1x64xf32>, vector<1x64xf32>, vector<1x64xf32>, vector<1x64xf32> -> vector<8x64xf32>
    %216 = tpu.concatenate %214, %190, %166, %142, %118, %94, %70, %46 in 0 : vector<1x64xf32>, vector<1x64xf32>, vector<1x64xf32>, vector<1x64xf32>, vector<1x64xf32>, vector<1x64xf32>, vector<1x64xf32>, vector<1x64xf32> -> vector<8x64xf32>
    %217 = tpu.iota {dimensions = array<i32: 1>} : vector<8x64xi32>
    %c32_i32_42 = arith.constant 32 : i32
    %218 = vector.broadcast %c32_i32_42 : i32 to vector<8x64xi32>
    %219 = arith.cmpi slt, %217, %218 : vector<8x64xi32>
    %220 = arith.select %219, %215, %216 : vector<8x64xi1>, vector<8x64xf32>
    %c1 = arith.constant 1 : index
    %c0_43 = arith.constant 0 : index
    %221 = vector.load %arg5[%c1, %c0_43] : memref<2x256xf32, #tpu.memory_space<vmem>>, vector<1x256xf32>
    %c1_44 = arith.constant 1 : index
    %c0_45 = arith.constant 0 : index
    %c0_46 = arith.constant 0 : index
    %222 = vector.load %arg4[%c1_44, %c0_45, %c0_46] : memref<2x64x256xf32, #tpu.memory_space<vmem>>, vector<1x64x256xf32>
    %223 = vector.shape_cast %222 : vector<1x64x256xf32> to vector<64x256xf32>
    %224 = arith.truncf %220 : vector<8x64xf32> to vector<8x64xbf16>
    %c0_47 = arith.constant 0 : index
    %c0_48 = arith.constant 0 : index
    %225 = vector.load %arg3[%c0_47, %c0_48] : memref<64x256xf32, #tpu.memory_space<vmem>>, vector<64x256xf32>
    %226 = arith.truncf %225 : vector<64x256xf32> to vector<64x256xbf16>
    %cst_49 = arith.constant dense<0.000000e+00> : vector<8x256xf32>
    %227 = tpu.matmul %224, %226, %cst_49 {dimension_numbers = #tpu.dot_dimension_numbers<[1], [0], [0], [1], [0, 0, 1, 1], [], []>} : vector<8x64xbf16>, vector<64x256xbf16>, vector<8x256xf32> -> vector<8x256xf32>
    %228 = vector.broadcast %221 : vector<1x256xf32> to vector<8x256xf32>
    %229 = arith.addf %227, %228 : vector<8x256xf32>
    %230 = arith.truncf %223 : vector<64x256xf32> to vector<64x256xbf16>
    %cst_50 = arith.constant 0.000000e+00 : f32
    %231 = vector.broadcast %cst_50 : f32 to vector<1x64xf32>
    %cst_51 = arith.constant 0.000000e+00 : f32
    %232 = vector.broadcast %cst_51 : f32 to vector<1x64xf32>
    %233 = arith.truncf %231 : vector<1x64xf32> to vector<1x64xbf16>
    %cst_52 = arith.constant dense<0.000000e+00> : vector<1x256xf32>
    %234 = tpu.matmul %233, %230, %cst_52 {dimension_numbers = #tpu.dot_dimension_numbers<[1], [0], [0], [1], [0, 0, 1, 1], [], []>} : vector<1x64xbf16>, vector<64x256xbf16>, vector<1x256xf32> -> vector<1x256xf32>
    %235 = vector.extract_strided_slice %229 {offsets = [0, 0], sizes = [1, 256], strides = [1, 1]} : vector<8x256xf32> to vector<1x256xf32>
    %236 = vector.extract_strided_slice %229 {offsets = [7, 0], sizes = [1, 256], strides = [1, 1]} : vector<8x256xf32> to vector<1x256xf32>
    %237 = arith.select %9, %235, %236 : vector<1x256xi1>, vector<1x256xf32>
    %238 = arith.addf %237, %234 : vector<1x256xf32>
    %cst_53 = arith.constant 5.000000e-01 : f32
    %239 = vector.broadcast %cst_53 : f32 to vector<1x256xf32>
    %240 = arith.mulf %239, %238 : vector<1x256xf32>
    %241 = arith.select %5, %238, %240 : vector<1x256xi1>, vector<1x256xf32>
    %242 = math.tanh %241 : vector<1x256xf32>
    %cst_54 = arith.constant 5.000000e-01 : f32
    %243 = vector.broadcast %cst_54 : f32 to vector<1x256xf32>
    %244 = arith.mulf %243, %242 : vector<1x256xf32>
    %cst_55 = arith.constant 5.000000e-01 : f32
    %245 = vector.broadcast %cst_55 : f32 to vector<1x256xf32>
    %246 = arith.addf %244, %245 : vector<1x256xf32>
    %247 = arith.select %5, %242, %246 : vector<1x256xi1>, vector<1x256xf32>
    %248 = vector.extract_strided_slice %247 {offsets = [0, 0], sizes = [1, 64], strides = [1, 1]} : vector<1x256xf32> to vector<1x64xf32>
    %249 = vector.extract_strided_slice %247 {offsets = [0, 64], sizes = [1, 64], strides = [1, 1]} : vector<1x256xf32> to vector<1x64xf32>
    %250 = vector.extract_strided_slice %247 {offsets = [0, 128], sizes = [1, 64], strides = [1, 1]} : vector<1x256xf32> to vector<1x64xf32>
    %251 = vector.extract_strided_slice %247 {offsets = [0, 192], sizes = [1, 64], strides = [1, 1]} : vector<1x256xf32> to vector<1x64xf32>
    %252 = arith.mulf %249, %232 : vector<1x64xf32>
    %253 = arith.mulf %248, %250 : vector<1x64xf32>
    %254 = arith.addf %252, %253 : vector<1x64xf32>
    %255 = math.tanh %254 : vector<1x64xf32>
    %256 = arith.mulf %251, %255 : vector<1x64xf32>
    %257 = arith.truncf %256 : vector<1x64xf32> to vector<1x64xbf16>
    %cst_56 = arith.constant dense<0.000000e+00> : vector<1x256xf32>
    %258 = tpu.matmul %257, %230, %cst_56 {dimension_numbers = #tpu.dot_dimension_numbers<[1], [0], [0], [1], [0, 0, 1, 1], [], []>} : vector<1x64xbf16>, vector<64x256xbf16>, vector<1x256xf32> -> vector<1x256xf32>
    %259 = vector.extract_strided_slice %229 {offsets = [1, 0], sizes = [1, 256], strides = [1, 1]} : vector<8x256xf32> to vector<1x256xf32>
    %260 = vector.extract_strided_slice %229 {offsets = [6, 0], sizes = [1, 256], strides = [1, 1]} : vector<8x256xf32> to vector<1x256xf32>
    %261 = arith.select %9, %259, %260 : vector<1x256xi1>, vector<1x256xf32>
    %262 = arith.addf %261, %258 : vector<1x256xf32>
    %cst_57 = arith.constant 5.000000e-01 : f32
    %263 = vector.broadcast %cst_57 : f32 to vector<1x256xf32>
    %264 = arith.mulf %263, %262 : vector<1x256xf32>
    %265 = arith.select %5, %262, %264 : vector<1x256xi1>, vector<1x256xf32>
    %266 = math.tanh %265 : vector<1x256xf32>
    %cst_58 = arith.constant 5.000000e-01 : f32
    %267 = vector.broadcast %cst_58 : f32 to vector<1x256xf32>
    %268 = arith.mulf %267, %266 : vector<1x256xf32>
    %cst_59 = arith.constant 5.000000e-01 : f32
    %269 = vector.broadcast %cst_59 : f32 to vector<1x256xf32>
    %270 = arith.addf %268, %269 : vector<1x256xf32>
    %271 = arith.select %5, %266, %270 : vector<1x256xi1>, vector<1x256xf32>
    %272 = vector.extract_strided_slice %271 {offsets = [0, 0], sizes = [1, 64], strides = [1, 1]} : vector<1x256xf32> to vector<1x64xf32>
    %273 = vector.extract_strided_slice %271 {offsets = [0, 64], sizes = [1, 64], strides = [1, 1]} : vector<1x256xf32> to vector<1x64xf32>
    %274 = vector.extract_strided_slice %271 {offsets = [0, 128], sizes = [1, 64], strides = [1, 1]} : vector<1x256xf32> to vector<1x64xf32>
    %275 = vector.extract_strided_slice %271 {offsets = [0, 192], sizes = [1, 64], strides = [1, 1]} : vector<1x256xf32> to vector<1x64xf32>
    %276 = arith.mulf %273, %254 : vector<1x64xf32>
    %277 = arith.mulf %272, %274 : vector<1x64xf32>
    %278 = arith.addf %276, %277 : vector<1x64xf32>
    %279 = math.tanh %278 : vector<1x64xf32>
    %280 = arith.mulf %275, %279 : vector<1x64xf32>
    %281 = arith.truncf %280 : vector<1x64xf32> to vector<1x64xbf16>
    %cst_60 = arith.constant dense<0.000000e+00> : vector<1x256xf32>
    %282 = tpu.matmul %281, %230, %cst_60 {dimension_numbers = #tpu.dot_dimension_numbers<[1], [0], [0], [1], [0, 0, 1, 1], [], []>} : vector<1x64xbf16>, vector<64x256xbf16>, vector<1x256xf32> -> vector<1x256xf32>
    %283 = vector.extract_strided_slice %229 {offsets = [2, 0], sizes = [1, 256], strides = [1, 1]} : vector<8x256xf32> to vector<1x256xf32>
    %284 = vector.extract_strided_slice %229 {offsets = [5, 0], sizes = [1, 256], strides = [1, 1]} : vector<8x256xf32> to vector<1x256xf32>
    %285 = arith.select %9, %283, %284 : vector<1x256xi1>, vector<1x256xf32>
    %286 = arith.addf %285, %282 : vector<1x256xf32>
    %cst_61 = arith.constant 5.000000e-01 : f32
    %287 = vector.broadcast %cst_61 : f32 to vector<1x256xf32>
    %288 = arith.mulf %287, %286 : vector<1x256xf32>
    %289 = arith.select %5, %286, %288 : vector<1x256xi1>, vector<1x256xf32>
    %290 = math.tanh %289 : vector<1x256xf32>
    %cst_62 = arith.constant 5.000000e-01 : f32
    %291 = vector.broadcast %cst_62 : f32 to vector<1x256xf32>
    %292 = arith.mulf %291, %290 : vector<1x256xf32>
    %cst_63 = arith.constant 5.000000e-01 : f32
    %293 = vector.broadcast %cst_63 : f32 to vector<1x256xf32>
    %294 = arith.addf %292, %293 : vector<1x256xf32>
    %295 = arith.select %5, %290, %294 : vector<1x256xi1>, vector<1x256xf32>
    %296 = vector.extract_strided_slice %295 {offsets = [0, 0], sizes = [1, 64], strides = [1, 1]} : vector<1x256xf32> to vector<1x64xf32>
    %297 = vector.extract_strided_slice %295 {offsets = [0, 64], sizes = [1, 64], strides = [1, 1]} : vector<1x256xf32> to vector<1x64xf32>
    %298 = vector.extract_strided_slice %295 {offsets = [0, 128], sizes = [1, 64], strides = [1, 1]} : vector<1x256xf32> to vector<1x64xf32>
    %299 = vector.extract_strided_slice %295 {offsets = [0, 192], sizes = [1, 64], strides = [1, 1]} : vector<1x256xf32> to vector<1x64xf32>
    %300 = arith.mulf %297, %278 : vector<1x64xf32>
    %301 = arith.mulf %296, %298 : vector<1x64xf32>
    %302 = arith.addf %300, %301 : vector<1x64xf32>
    %303 = math.tanh %302 : vector<1x64xf32>
    %304 = arith.mulf %299, %303 : vector<1x64xf32>
    %305 = arith.truncf %304 : vector<1x64xf32> to vector<1x64xbf16>
    %cst_64 = arith.constant dense<0.000000e+00> : vector<1x256xf32>
    %306 = tpu.matmul %305, %230, %cst_64 {dimension_numbers = #tpu.dot_dimension_numbers<[1], [0], [0], [1], [0, 0, 1, 1], [], []>} : vector<1x64xbf16>, vector<64x256xbf16>, vector<1x256xf32> -> vector<1x256xf32>
    %307 = vector.extract_strided_slice %229 {offsets = [3, 0], sizes = [1, 256], strides = [1, 1]} : vector<8x256xf32> to vector<1x256xf32>
    %308 = vector.extract_strided_slice %229 {offsets = [4, 0], sizes = [1, 256], strides = [1, 1]} : vector<8x256xf32> to vector<1x256xf32>
    %309 = arith.select %9, %307, %308 : vector<1x256xi1>, vector<1x256xf32>
    %310 = arith.addf %309, %306 : vector<1x256xf32>
    %cst_65 = arith.constant 5.000000e-01 : f32
    %311 = vector.broadcast %cst_65 : f32 to vector<1x256xf32>
    %312 = arith.mulf %311, %310 : vector<1x256xf32>
    %313 = arith.select %5, %310, %312 : vector<1x256xi1>, vector<1x256xf32>
    %314 = math.tanh %313 : vector<1x256xf32>
    %cst_66 = arith.constant 5.000000e-01 : f32
    %315 = vector.broadcast %cst_66 : f32 to vector<1x256xf32>
    %316 = arith.mulf %315, %314 : vector<1x256xf32>
    %cst_67 = arith.constant 5.000000e-01 : f32
    %317 = vector.broadcast %cst_67 : f32 to vector<1x256xf32>
    %318 = arith.addf %316, %317 : vector<1x256xf32>
    %319 = arith.select %5, %314, %318 : vector<1x256xi1>, vector<1x256xf32>
    %320 = vector.extract_strided_slice %319 {offsets = [0, 0], sizes = [1, 64], strides = [1, 1]} : vector<1x256xf32> to vector<1x64xf32>
    %321 = vector.extract_strided_slice %319 {offsets = [0, 64], sizes = [1, 64], strides = [1, 1]} : vector<1x256xf32> to vector<1x64xf32>
    %322 = vector.extract_strided_slice %319 {offsets = [0, 128], sizes = [1, 64], strides = [1, 1]} : vector<1x256xf32> to vector<1x64xf32>
    %323 = vector.extract_strided_slice %319 {offsets = [0, 192], sizes = [1, 64], strides = [1, 1]} : vector<1x256xf32> to vector<1x64xf32>
    %324 = arith.mulf %321, %302 : vector<1x64xf32>
    %325 = arith.mulf %320, %322 : vector<1x64xf32>
    %326 = arith.addf %324, %325 : vector<1x64xf32>
    %327 = math.tanh %326 : vector<1x64xf32>
    %328 = arith.mulf %323, %327 : vector<1x64xf32>
    %329 = arith.truncf %328 : vector<1x64xf32> to vector<1x64xbf16>
    %cst_68 = arith.constant dense<0.000000e+00> : vector<1x256xf32>
    %330 = tpu.matmul %329, %230, %cst_68 {dimension_numbers = #tpu.dot_dimension_numbers<[1], [0], [0], [1], [0, 0, 1, 1], [], []>} : vector<1x64xbf16>, vector<64x256xbf16>, vector<1x256xf32> -> vector<1x256xf32>
    %331 = vector.extract_strided_slice %229 {offsets = [4, 0], sizes = [1, 256], strides = [1, 1]} : vector<8x256xf32> to vector<1x256xf32>
    %332 = vector.extract_strided_slice %229 {offsets = [3, 0], sizes = [1, 256], strides = [1, 1]} : vector<8x256xf32> to vector<1x256xf32>
    %333 = arith.select %9, %331, %332 : vector<1x256xi1>, vector<1x256xf32>
    %334 = arith.addf %333, %330 : vector<1x256xf32>
    %cst_69 = arith.constant 5.000000e-01 : f32
    %335 = vector.broadcast %cst_69 : f32 to vector<1x256xf32>
    %336 = arith.mulf %335, %334 : vector<1x256xf32>
    %337 = arith.select %5, %334, %336 : vector<1x256xi1>, vector<1x256xf32>
    %338 = math.tanh %337 : vector<1x256xf32>
    %cst_70 = arith.constant 5.000000e-01 : f32
    %339 = vector.broadcast %cst_70 : f32 to vector<1x256xf32>
    %340 = arith.mulf %339, %338 : vector<1x256xf32>
    %cst_71 = arith.constant 5.000000e-01 : f32
    %341 = vector.broadcast %cst_71 : f32 to vector<1x256xf32>
    %342 = arith.addf %340, %341 : vector<1x256xf32>
    %343 = arith.select %5, %338, %342 : vector<1x256xi1>, vector<1x256xf32>
    %344 = vector.extract_strided_slice %343 {offsets = [0, 0], sizes = [1, 64], strides = [1, 1]} : vector<1x256xf32> to vector<1x64xf32>
    %345 = vector.extract_strided_slice %343 {offsets = [0, 64], sizes = [1, 64], strides = [1, 1]} : vector<1x256xf32> to vector<1x64xf32>
    %346 = vector.extract_strided_slice %343 {offsets = [0, 128], sizes = [1, 64], strides = [1, 1]} : vector<1x256xf32> to vector<1x64xf32>
    %347 = vector.extract_strided_slice %343 {offsets = [0, 192], sizes = [1, 64], strides = [1, 1]} : vector<1x256xf32> to vector<1x64xf32>
    %348 = arith.mulf %345, %326 : vector<1x64xf32>
    %349 = arith.mulf %344, %346 : vector<1x64xf32>
    %350 = arith.addf %348, %349 : vector<1x64xf32>
    %351 = math.tanh %350 : vector<1x64xf32>
    %352 = arith.mulf %347, %351 : vector<1x64xf32>
    %353 = arith.truncf %352 : vector<1x64xf32> to vector<1x64xbf16>
    %cst_72 = arith.constant dense<0.000000e+00> : vector<1x256xf32>
    %354 = tpu.matmul %353, %230, %cst_72 {dimension_numbers = #tpu.dot_dimension_numbers<[1], [0], [0], [1], [0, 0, 1, 1], [], []>} : vector<1x64xbf16>, vector<64x256xbf16>, vector<1x256xf32> -> vector<1x256xf32>
    %355 = vector.extract_strided_slice %229 {offsets = [5, 0], sizes = [1, 256], strides = [1, 1]} : vector<8x256xf32> to vector<1x256xf32>
    %356 = vector.extract_strided_slice %229 {offsets = [2, 0], sizes = [1, 256], strides = [1, 1]} : vector<8x256xf32> to vector<1x256xf32>
    %357 = arith.select %9, %355, %356 : vector<1x256xi1>, vector<1x256xf32>
    %358 = arith.addf %357, %354 : vector<1x256xf32>
    %cst_73 = arith.constant 5.000000e-01 : f32
    %359 = vector.broadcast %cst_73 : f32 to vector<1x256xf32>
    %360 = arith.mulf %359, %358 : vector<1x256xf32>
    %361 = arith.select %5, %358, %360 : vector<1x256xi1>, vector<1x256xf32>
    %362 = math.tanh %361 : vector<1x256xf32>
    %cst_74 = arith.constant 5.000000e-01 : f32
    %363 = vector.broadcast %cst_74 : f32 to vector<1x256xf32>
    %364 = arith.mulf %363, %362 : vector<1x256xf32>
    %cst_75 = arith.constant 5.000000e-01 : f32
    %365 = vector.broadcast %cst_75 : f32 to vector<1x256xf32>
    %366 = arith.addf %364, %365 : vector<1x256xf32>
    %367 = arith.select %5, %362, %366 : vector<1x256xi1>, vector<1x256xf32>
    %368 = vector.extract_strided_slice %367 {offsets = [0, 0], sizes = [1, 64], strides = [1, 1]} : vector<1x256xf32> to vector<1x64xf32>
    %369 = vector.extract_strided_slice %367 {offsets = [0, 64], sizes = [1, 64], strides = [1, 1]} : vector<1x256xf32> to vector<1x64xf32>
    %370 = vector.extract_strided_slice %367 {offsets = [0, 128], sizes = [1, 64], strides = [1, 1]} : vector<1x256xf32> to vector<1x64xf32>
    %371 = vector.extract_strided_slice %367 {offsets = [0, 192], sizes = [1, 64], strides = [1, 1]} : vector<1x256xf32> to vector<1x64xf32>
    %372 = arith.mulf %369, %350 : vector<1x64xf32>
    %373 = arith.mulf %368, %370 : vector<1x64xf32>
    %374 = arith.addf %372, %373 : vector<1x64xf32>
    %375 = math.tanh %374 : vector<1x64xf32>
    %376 = arith.mulf %371, %375 : vector<1x64xf32>
    %377 = arith.truncf %376 : vector<1x64xf32> to vector<1x64xbf16>
    %cst_76 = arith.constant dense<0.000000e+00> : vector<1x256xf32>
    %378 = tpu.matmul %377, %230, %cst_76 {dimension_numbers = #tpu.dot_dimension_numbers<[1], [0], [0], [1], [0, 0, 1, 1], [], []>} : vector<1x64xbf16>, vector<64x256xbf16>, vector<1x256xf32> -> vector<1x256xf32>
    %379 = vector.extract_strided_slice %229 {offsets = [6, 0], sizes = [1, 256], strides = [1, 1]} : vector<8x256xf32> to vector<1x256xf32>
    %380 = vector.extract_strided_slice %229 {offsets = [1, 0], sizes = [1, 256], strides = [1, 1]} : vector<8x256xf32> to vector<1x256xf32>
    %381 = arith.select %9, %379, %380 : vector<1x256xi1>, vector<1x256xf32>
    %382 = arith.addf %381, %378 : vector<1x256xf32>
    %cst_77 = arith.constant 5.000000e-01 : f32
    %383 = vector.broadcast %cst_77 : f32 to vector<1x256xf32>
    %384 = arith.mulf %383, %382 : vector<1x256xf32>
    %385 = arith.select %5, %382, %384 : vector<1x256xi1>, vector<1x256xf32>
    %386 = math.tanh %385 : vector<1x256xf32>
    %cst_78 = arith.constant 5.000000e-01 : f32
    %387 = vector.broadcast %cst_78 : f32 to vector<1x256xf32>
    %388 = arith.mulf %387, %386 : vector<1x256xf32>
    %cst_79 = arith.constant 5.000000e-01 : f32
    %389 = vector.broadcast %cst_79 : f32 to vector<1x256xf32>
    %390 = arith.addf %388, %389 : vector<1x256xf32>
    %391 = arith.select %5, %386, %390 : vector<1x256xi1>, vector<1x256xf32>
    %392 = vector.extract_strided_slice %391 {offsets = [0, 0], sizes = [1, 64], strides = [1, 1]} : vector<1x256xf32> to vector<1x64xf32>
    %393 = vector.extract_strided_slice %391 {offsets = [0, 64], sizes = [1, 64], strides = [1, 1]} : vector<1x256xf32> to vector<1x64xf32>
    %394 = vector.extract_strided_slice %391 {offsets = [0, 128], sizes = [1, 64], strides = [1, 1]} : vector<1x256xf32> to vector<1x64xf32>
    %395 = vector.extract_strided_slice %391 {offsets = [0, 192], sizes = [1, 64], strides = [1, 1]} : vector<1x256xf32> to vector<1x64xf32>
    %396 = arith.mulf %393, %374 : vector<1x64xf32>
    %397 = arith.mulf %392, %394 : vector<1x64xf32>
    %398 = arith.addf %396, %397 : vector<1x64xf32>
    %399 = math.tanh %398 : vector<1x64xf32>
    %400 = arith.mulf %395, %399 : vector<1x64xf32>
    %401 = arith.truncf %400 : vector<1x64xf32> to vector<1x64xbf16>
    %cst_80 = arith.constant dense<0.000000e+00> : vector<1x256xf32>
    %402 = tpu.matmul %401, %230, %cst_80 {dimension_numbers = #tpu.dot_dimension_numbers<[1], [0], [0], [1], [0, 0, 1, 1], [], []>} : vector<1x64xbf16>, vector<64x256xbf16>, vector<1x256xf32> -> vector<1x256xf32>
    %403 = vector.extract_strided_slice %229 {offsets = [7, 0], sizes = [1, 256], strides = [1, 1]} : vector<8x256xf32> to vector<1x256xf32>
    %404 = vector.extract_strided_slice %229 {offsets = [0, 0], sizes = [1, 256], strides = [1, 1]} : vector<8x256xf32> to vector<1x256xf32>
    %405 = arith.select %9, %403, %404 : vector<1x256xi1>, vector<1x256xf32>
    %406 = arith.addf %405, %402 : vector<1x256xf32>
    %cst_81 = arith.constant 5.000000e-01 : f32
    %407 = vector.broadcast %cst_81 : f32 to vector<1x256xf32>
    %408 = arith.mulf %407, %406 : vector<1x256xf32>
    %409 = arith.select %5, %406, %408 : vector<1x256xi1>, vector<1x256xf32>
    %410 = math.tanh %409 : vector<1x256xf32>
    %cst_82 = arith.constant 5.000000e-01 : f32
    %411 = vector.broadcast %cst_82 : f32 to vector<1x256xf32>
    %412 = arith.mulf %411, %410 : vector<1x256xf32>
    %cst_83 = arith.constant 5.000000e-01 : f32
    %413 = vector.broadcast %cst_83 : f32 to vector<1x256xf32>
    %414 = arith.addf %412, %413 : vector<1x256xf32>
    %415 = arith.select %5, %410, %414 : vector<1x256xi1>, vector<1x256xf32>
    %416 = vector.extract_strided_slice %415 {offsets = [0, 0], sizes = [1, 64], strides = [1, 1]} : vector<1x256xf32> to vector<1x64xf32>
    %417 = vector.extract_strided_slice %415 {offsets = [0, 64], sizes = [1, 64], strides = [1, 1]} : vector<1x256xf32> to vector<1x64xf32>
    %418 = vector.extract_strided_slice %415 {offsets = [0, 128], sizes = [1, 64], strides = [1, 1]} : vector<1x256xf32> to vector<1x64xf32>
    %419 = vector.extract_strided_slice %415 {offsets = [0, 192], sizes = [1, 64], strides = [1, 1]} : vector<1x256xf32> to vector<1x64xf32>
    %420 = arith.mulf %417, %398 : vector<1x64xf32>
    %421 = arith.mulf %416, %418 : vector<1x64xf32>
    %422 = arith.addf %420, %421 : vector<1x64xf32>
    %423 = math.tanh %422 : vector<1x64xf32>
    %424 = arith.mulf %419, %423 : vector<1x64xf32>
    %425 = tpu.concatenate %256, %280, %304, %328, %352, %376, %400, %424 in 0 : vector<1x64xf32>, vector<1x64xf32>, vector<1x64xf32>, vector<1x64xf32>, vector<1x64xf32>, vector<1x64xf32>, vector<1x64xf32>, vector<1x64xf32> -> vector<8x64xf32>
    %426 = tpu.concatenate %424, %400, %376, %352, %328, %304, %280, %256 in 0 : vector<1x64xf32>, vector<1x64xf32>, vector<1x64xf32>, vector<1x64xf32>, vector<1x64xf32>, vector<1x64xf32>, vector<1x64xf32>, vector<1x64xf32> -> vector<8x64xf32>
    %427 = tpu.iota {dimensions = array<i32: 1>} : vector<8x64xi32>
    %c32_i32_84 = arith.constant 32 : i32
    %428 = vector.broadcast %c32_i32_84 : i32 to vector<8x64xi32>
    %429 = arith.cmpi slt, %427, %428 : vector<8x64xi32>
    %430 = arith.select %429, %425, %426 : vector<8x64xi1>, vector<8x64xf32>
    %431 = tpu.concatenate %220, %430 in 1 : vector<8x64xf32>, vector<8x64xf32> -> vector<8x128xf32>
    %432 = arith.truncf %431 : vector<8x128xf32> to vector<8x128xbf16>
    %c0_85 = arith.constant 0 : index
    %c0_86 = arith.constant 0 : index
    %433 = vector.load %arg6[%c0_85, %c0_86] : memref<128x128xf32, #tpu.memory_space<vmem>>, vector<128x128xf32>
    %434 = arith.truncf %433 : vector<128x128xf32> to vector<128x128xbf16>
    %cst_87 = arith.constant dense<0.000000e+00> : vector<8x128xf32>
    %435 = tpu.matmul %432, %434, %cst_87 {dimension_numbers = #tpu.dot_dimension_numbers<[1], [0], [0], [1], [0, 0, 1, 1], [], []>} : vector<8x128xbf16>, vector<128x128xbf16>, vector<8x128xf32> -> vector<8x128xf32>
    %c0_88 = arith.constant 0 : index
    %c0_89 = arith.constant 0 : index
    %436 = vector.load %arg7[%c0_88, %c0_89] : memref<1x128xf32, #tpu.memory_space<vmem>>, vector<1x128xf32>
    %437 = vector.broadcast %436 : vector<1x128xf32> to vector<8x128xf32>
    %438 = arith.addf %435, %437 : vector<8x128xf32>
    %439 = arith.negf %438 : vector<8x128xf32>
    %440 = math.exp %439 : vector<8x128xf32>
    %cst_90 = arith.constant 1.000000e+00 : f32
    %441 = vector.broadcast %cst_90 : f32 to vector<8x128xf32>
    %442 = arith.addf %441, %440 : vector<8x128xf32>
    %443 = arith.divf %441, %442 : vector<8x128xf32>
    %444 = arith.mulf %438, %443 : vector<8x128xf32>
    %445 = arith.addf %220, %430 : vector<8x64xf32>
    %446 = vector.extract_strided_slice %444 {offsets = [0, 0], sizes = [8, 64], strides = [1, 1]} : vector<8x128xf32> to vector<8x64xf32>
    %447 = arith.addf %445, %446 : vector<8x64xf32>
    %448 = vector.extract_strided_slice %444 {offsets = [0, 64], sizes = [8, 64], strides = [1, 1]} : vector<8x128xf32> to vector<8x64xf32>
    %449 = arith.addf %447, %448 : vector<8x64xf32>
    %c0_91 = arith.constant 0 : index
    %c0_92 = arith.constant 0 : index
    %450 = vector.load %arg12[%c0_91, %c0_92] : memref<1x14xf32, #tpu.memory_space<vmem>>, vector<1x14xf32>
    %c0_93 = arith.constant 0 : index
    %c0_94 = arith.constant 0 : index
    %451 = vector.load %arg10[%c0_93, %c0_94] : memref<64x1xf32, #tpu.memory_space<vmem>>, vector<64x1xf32>
    %cst_95 = arith.constant dense<0.000000e+00> : vector<8x1xf32>
    %452 = tpu.matmul %449, %451, %cst_95 {dimension_numbers = #tpu.dot_dimension_numbers<[1], [0], [0], [1], [0, 0, 1, 1], [], []>} : vector<8x64xf32>, vector<64x1xf32>, vector<8x1xf32> -> vector<8x1xf32>
    %453 = vector.extract_strided_slice %450 {offsets = [0, 0], sizes = [1, 1], strides = [1, 1]} : vector<1x14xf32> to vector<1x1xf32>
    %454 = vector.broadcast %453 : vector<1x1xf32> to vector<8x1xf32>
    %455 = arith.addf %452, %454 : vector<8x1xf32>
    %c0_96 = arith.constant 0 : index
    %c0_97 = arith.constant 0 : index
    %456 = vector.load %arg13[%c0_96, %c0_97] : memref<8x1xf32, #tpu.memory_space<vmem>>, vector<8x1xf32>
    tpu.vector_store %arg13[%c0_96, %c0_97], %455 {strides = array<i32>} : memref<8x1xf32, #tpu.memory_space<vmem>>, vector<8x1xf32>,
    %cst_98 = arith.constant dense<0.000000e+00> : vector<64xf32>
    %457 = vector.multi_reduction <add>, %449, %cst_98 [0] : vector<8x64xf32> to vector<64xf32>
    %458 = vector.shape_cast %457 : vector<64xf32> to vector<1x64xf32>
    %cst_99 = arith.constant 8.000000e+00 : f32
    %459 = vector.broadcast %cst_99 : f32 to vector<1x64xf32>
    %460 = arith.divf %458, %459 : vector<1x64xf32>
    %c0_100 = arith.constant 0 : index
    %c0_101 = arith.constant 0 : index
    %461 = vector.load %arg1[%c0_100, %c0_101] : memref<1x128xf32, #tpu.memory_space<vmem>>, vector<1x128xf32>
    %c0_102 = arith.constant 0 : index
    %c0_103 = arith.constant 0 : index
    %462 = vector.load %arg8[%c0_102, %c0_103] : memref<128x128xf32, #tpu.memory_space<vmem>>, vector<128x128xf32>
    %cst_104 = arith.constant dense<0.000000e+00> : vector<1x128xf32>
    %463 = tpu.matmul %461, %462, %cst_104 {dimension_numbers = #tpu.dot_dimension_numbers<[1], [0], [0], [1], [0, 0, 1, 1], [], []>} : vector<1x128xf32>, vector<128x128xf32>, vector<1x128xf32> -> vector<1x128xf32>
    %c0_105 = arith.constant 0 : index
    %c0_106 = arith.constant 0 : index
    %464 = vector.load %arg9[%c0_105, %c0_106] : memref<1x128xf32, #tpu.memory_space<vmem>>, vector<1x128xf32>
    %465 = arith.addf %463, %464 : vector<1x128xf32>
    %466 = arith.negf %465 : vector<1x128xf32>
    %467 = math.exp %466 : vector<1x128xf32>
    %cst_107 = arith.constant 1.000000e+00 : f32
    %468 = vector.broadcast %cst_107 : f32 to vector<1x128xf32>
    %469 = arith.addf %468, %467 : vector<1x128xf32>
    %470 = arith.divf %468, %469 : vector<1x128xf32>
    %471 = arith.mulf %465, %470 : vector<1x128xf32>
    %472 = arith.addf %461, %471 : vector<1x128xf32>
    %473 = vector.extract_strided_slice %472 {offsets = [0, 0], sizes = [1, 64], strides = [1, 1]} : vector<1x128xf32> to vector<1x64xf32>
    %474 = vector.extract_strided_slice %472 {offsets = [0, 64], sizes = [1, 64], strides = [1, 1]} : vector<1x128xf32> to vector<1x64xf32>
    %475 = tpu.concatenate %460, %473, %460, %474 in 1 : vector<1x64xf32>, vector<1x64xf32>, vector<1x64xf32>, vector<1x64xf32> -> vector<1x256xf32>
    %c0_108 = arith.constant 0 : index
    %c0_109 = arith.constant 0 : index
    %476 = vector.load %arg11[%c0_108, %c0_109] : memref<256x13xf32, #tpu.memory_space<vmem>>, vector<256x13xf32>
    %cst_110 = arith.constant dense<0.000000e+00> : vector<1x13xf32>
    %477 = tpu.matmul %475, %476, %cst_110 {dimension_numbers = #tpu.dot_dimension_numbers<[1], [0], [0], [1], [0, 0, 1, 1], [], []>} : vector<1x256xf32>, vector<256x13xf32>, vector<1x13xf32> -> vector<1x13xf32>
    %478 = vector.extract_strided_slice %450 {offsets = [0, 1], sizes = [1, 13], strides = [1, 1]} : vector<1x14xf32> to vector<1x13xf32>
    %479 = arith.addf %477, %478 : vector<1x13xf32>
    %c0_111 = arith.constant 0 : index
    %c0_112 = arith.constant 0 : index
    %480 = vector.load %arg14[%c0_111, %c0_112] : memref<1x13xf32, #tpu.memory_space<vmem>>, vector<1x13xf32>
    tpu.vector_store %arg14[%c0_111, %c0_112], %479 {strides = array<i32>} : memref<1x13xf32, #tpu.memory_space<vmem>>, vector<1x13xf32>,
    return
  }
}

</mosaic_0001>

<llo_original>
// kernel: neural_net_forward.1
$region0: #{neural_net_forward.1}
  #allocation0 [shape = 'u32[]', space=smem, size = 0x4, offset = 0x4, fixed_abs, tag = 'smem constant byte address 0x4 - core index']
  #allocation1 [shape = 'u32[144,128]{1,0:T(1,128)}', space=vmem, size = 0x12000, scoped, tag = 'internal scratch']
  %s0 = inlined_call_operand.vmem [shape: f32[8,64], index: 0, kind: input, shape index: {}]
  %s1 = inlined_call_operand.vmem [shape: f32[1,128], index: 1, kind: input, shape index: {}]
  %s2 = inlined_call_operand.vmem [shape: f32[64,256], index: 2, kind: input, shape index: {}]
  %s3 = inlined_call_operand.hbm [shape: f32[64,256], index: 3, kind: input, shape index: {}]
  %s4 = inlined_call_operand.vmem [shape: f32[2,64,256], index: 4, kind: input, shape index: {}]
  %s5 = inlined_call_operand.vmem [shape: f32[2,256], index: 5, kind: input, shape index: {}]
  %s6 = inlined_call_operand.hbm [shape: f32[128,128], index: 6, kind: input, shape index: {}]
  %s7 = inlined_call_operand.vmem [shape: f32[1,128], index: 7, kind: input, shape index: {}]
  %s8 = inlined_call_operand.hbm [shape: f32[128,128], index: 8, kind: input, shape index: {}]
  %s9 = inlined_call_operand.vmem [shape: f32[1,128], index: 9, kind: input, shape index: {}]
  %s10 = inlined_call_operand.vmem [shape: f32[64,1], index: 10, kind: input, shape index: {}]
  %s11 = inlined_call_operand.vmem [shape: f32[256,13], index: 11, kind: input, shape index: {}]
  %s12 = inlined_call_operand.vmem [shape: f32[1,14], index: 12, kind: input, shape index: {}]
  %s13 = inlined_call_operand.vmem [shape: f32[8,1], index: 13, kind: output, shape index: {0}]
  %s14 = inlined_call_operand.vmem [shape: f32[1,13], index: 14, kind: output, shape index: {1}]
  %15 = xla_tuple %s13, %s14
  %s16 = sld [smem:[#allocation0]]
  $region82: #{neural_net_forward.1} parent=0
    _
  %s18 = ssub.s32 1, %s16
  %s19 = scalar_select 0, %s18, %s16
  $region1: #{neural_net_forward.1} parent=0
    #allocation2 [shape = 'u8[65536]{0}', space=vmem, size = 0x10000, scoped, tag = 'input window, operand 3, single buffered']
    #allocation3 [shape = 's32[1]{0}', space=sflag, size = 0x4, scoped, tag = 'scoped memory for neural_net_forward.1']
    #allocation4 [shape = 'u8[65536]{0}', space=vmem, size = 0x10000, scoped, tag = 'input window, operand 6, single buffered']
    #allocation5 [shape = 's32[1]{0}', space=sflag, size = 0x4, scoped, tag = 'scoped memory for neural_net_forward.1']
    #allocation6 [shape = 'u8[65536]{0}', space=vmem, size = 0x10000, scoped, tag = 'input window, operand 8, single buffered']
    %20 = vsyncpa [#allocation3], 0
    %21 = vsyncpa [#allocation5], 0
    // Predicated region
    $region2: #{neural_net_forward.1} parent=1 // pred_check
      _
    $region3: #{neural_net_forward.1} parent=1 // pred_check_branch
      %23 = sbr.rel (0) target = $region5
    $region4: #{neural_net_forward.1} parent=1 // pred_region
      _
    $region5: #{neural_net_forward.1} parent=1 // pred_fallthru
      _
    // Predicated region
    $region6: #{neural_net_forward.1} parent=1 // pred_check
      _
    $region7: #{neural_net_forward.1} parent=1 // pred_check_branch
      %25 = sbr.rel (0) target = $region9
    $region8: #{neural_net_forward.1} parent=1 // pred_region
      _
    $region9: #{neural_net_forward.1} parent=1 // pred_fallthru
      _
    // Predicated region
    $region10: #{neural_net_forward.1} parent=1 // pred_check
      _
    $region11: #{neural_net_forward.1} parent=1 // pred_check_branch
      %27 = sbr.rel (0) target = $region13
    $region12: #{neural_net_forward.1} parent=1 // pred_region
      _
    $region13: #{neural_net_forward.1} parent=1 // pred_fallthru
      _
    // Predicated region
    $region14: #{neural_net_forward.1} parent=1 // pred_check
      _
    $region15: #{neural_net_forward.1} parent=1 // pred_check_branch
      %29 = sbr.rel (0) target = $region17
    $region16: #{neural_net_forward.1} parent=1 // pred_region
      %s31 = ssub.s32 2048, 2048
      %32 = vsyncadd [#allocation3], %s31
      %s33 = sshll.u32 [#allocation2], 4
      %s34 = int_to_ptr.vmem [resolvable:$true] %s33
      %39 = dma.hbm_to_vmem [thread:$0]  %s3, 2048, %s34, [#allocation3], 256, 256, 16
    $region17: #{neural_net_forward.1} parent=1 // pred_fallthru
      _
    // Predicated region
    $region18: #{neural_net_forward.1} parent=1 // pred_check
      _
    $region19: #{neural_net_forward.1} parent=1 // pred_check_branch
      %41 = sbr.rel (0) target = $region21
    $region20: #{neural_net_forward.1} parent=1 // pred_region
      _
    $region21: #{neural_net_forward.1} parent=1 // pred_fallthru
      _
    // Predicated region
    $region22: #{neural_net_forward.1} parent=1 // pred_check
      _
    $region23: #{neural_net_forward.1} parent=1 // pred_check_branch
      %43 = sbr.rel (0) target = $region25
    $region24: #{neural_net_forward.1} parent=1 // pred_region
      _
    $region25: #{neural_net_forward.1} parent=1 // pred_fallthru
      _
    // Predicated region
    $region26: #{neural_net_forward.1} parent=1 // pred_check
      _
    $region27: #{neural_net_forward.1} parent=1 // pred_check_branch
      %45 = sbr.rel (0) target = $region29
    $region28: #{neural_net_forward.1} parent=1 // pred_region
      %s47 = ssub.s32 2048, 2048
      %48 = vsyncadd [#allocation5], %s47
      %s49 = sshll.u32 [#allocation4], 4
      %s50 = int_to_ptr.vmem [resolvable:$true] %s49
      %55 = dma.hbm_to_vmem [thread:$0]  %s6, 2048, %s50, [#allocation5], 128, 128, 8
    $region29: #{neural_net_forward.1} parent=1 // pred_fallthru
      _
    // Predicated region
    $region30: #{neural_net_forward.1} parent=1 // pred_check
      _
    $region31: #{neural_net_forward.1} parent=1 // pred_check_branch
      %57 = sbr.rel (0) target = $region33
    $region32: #{neural_net_forward.1} parent=1 // pred_region
      _
    $region33: #{neural_net_forward.1} parent=1 // pred_fallthru
      _
    // Predicated region
    $region34: #{neural_net_forward.1} parent=1 // pred_check
      _
    $region35: #{neural_net_forward.1} parent=1 // pred_check_branch
      %59 = sbr.rel (0) target = $region37
    $region36: #{neural_net_forward.1} parent=1 // pred_region
      %s61 = ssub.s32 2048, 2048
      %62 = vsyncadd [#allocation5], %s61
      %s63 = sshll.u32 [#allocation6], 4
      %s64 = int_to_ptr.vmem [resolvable:$true] %s63
      %69 = dma.hbm_to_vmem [thread:$0]  %s8, 2048, %s64, [#allocation5], 128, 128, 8
    $region37: #{neural_net_forward.1} parent=1 // pred_fallthru
      _
    // Predicated region
    $region38: #{neural_net_forward.1} parent=1 // pred_check
      _
    $region39: #{neural_net_forward.1} parent=1 // pred_check_branch
      %71 = sbr.rel (0) target = $region41
    $region40: #{neural_net_forward.1} parent=1 // pred_region
      _
    $region41: #{neural_net_forward.1} parent=1 // pred_fallthru
      _
    // Predicated region
    $region42: #{neural_net_forward.1} parent=1 // pred_check
      _
    $region43: #{neural_net_forward.1} parent=1 // pred_check_branch
      %73 = sbr.rel (0) target = $region45
    $region44: #{neural_net_forward.1} parent=1 // pred_region
      _
    $region45: #{neural_net_forward.1} parent=1 // pred_fallthru
      _
    // Predicated region
    $region46: #{neural_net_forward.1} parent=1 // pred_check
      _
    $region47: #{neural_net_forward.1} parent=1 // pred_check_branch
      %75 = sbr.rel (0) target = $region49
    $region48: #{neural_net_forward.1} parent=1 // pred_region
      _
    $region49: #{neural_net_forward.1} parent=1 // pred_fallthru
      _
    // Predicated region
    $region50: #{neural_net_forward.1} parent=1 // pred_check
      _
    $region51: #{neural_net_forward.1} parent=1 // pred_check_branch
      %77 = sbr.rel (0) target = $region53
    $region52: #{neural_net_forward.1} parent=1 // pred_region
      _
    $region53: #{neural_net_forward.1} parent=1 // pred_fallthru
      _
    // Predicated region
    $region54: #{neural_net_forward.1} parent=1 // pred_check
      _
    $region55: #{neural_net_forward.1} parent=1 // pred_check_branch
      %79 = sbr.rel (0) target = $region57
    $region56: #{neural_net_forward.1} parent=1 // pred_region
      %80 = dma.done [#allocation3], 2048
    $region57: #{neural_net_forward.1} parent=1 // pred_fallthru
      _
    // Predicated region
    $region58: #{neural_net_forward.1} parent=1 // pred_check
      _
    $region59: #{neural_net_forward.1} parent=1 // pred_check_branch
      %82 = sbr.rel (0) target = $region61
    $region60: #{neural_net_forward.1} parent=1 // pred_region
      %83 = dma.done [#allocation5], 2048
    $region61: #{neural_net_forward.1} parent=1 // pred_fallthru
      _
    // Predicated region
    $region62: #{neural_net_forward.1} parent=1 // pred_check
      _
    $region63: #{neural_net_forward.1} parent=1 // pred_check_branch
      %85 = sbr.rel (0) target = $region65
    $region64: #{neural_net_forward.1} parent=1 // pred_region
      %86 = dma.done [#allocation5], 2048
    $region65: #{neural_net_forward.1} parent=1 // pred_fallthru
      _
    %v88 = vlaneseq
    %v89 = vand.u32 %v88, 127
    %v90 = vadd.s32 %v89, 128
    %vm91 = vcmp.ge.s32.totalorder %v89, 128
    %vm92 = vcmp.ge.s32.totalorder %v90, 128
    %vm93 = vcmp.lt.s32.totalorder %v89, 192
    %vm94 = vcmp.lt.s32.totalorder %v90, 192
    %vm95 = vmand %vm91, %vm93
    %vm96 = vmand %vm92, %vm94
    %v97 = vand.u32 %v89, 32
    %v98 = vand.u32 %v90, 32
    %vm99 = vcmp.eq.s32.totalorder %v97, 0
    %vm100 = vcmp.eq.s32.totalorder %v98, 0
    %v101 = vld [vmem:[%s0] sm:$0xff]
    %v102 = vld [vmem:[%s5] ss:$2 sm:$0x3]
    %v103 = vld [vmem:[%s4] sm:$0xff]
    %v104 = vld [vmem:[%s4 + $0x8] sm:$0xff]
    %v105 = vld [vmem:[%s4 + $0x10] sm:$0xff]
    %v106 = vld [vmem:[%s4 + $0x18] sm:$0xff]
    %v107 = vld [vmem:[%s4 + $0x20] sm:$0xff]
    %v108 = vld [vmem:[%s4 + $0x28] sm:$0xff]
    %v109 = vld [vmem:[%s4 + $0x30] sm:$0xff]
    %v110 = vld [vmem:[%s4 + $0x38] sm:$0xff]
    %v111 = vld [vmem:[%s4 + $0x40] sm:$0xff]
    %v112 = vld [vmem:[%s4 + $0x48] sm:$0xff]
    %v113 = vld [vmem:[%s4 + $0x50] sm:$0xff]
    %v114 = vld [vmem:[%s4 + $0x58] sm:$0xff]
    %v115 = vld [vmem:[%s4 + $0x60] sm:$0xff]
    %v116 = vld [vmem:[%s4 + $0x68] sm:$0xff]
    %v117 = vld [vmem:[%s4 + $0x70] sm:$0xff]
    %v118 = vld [vmem:[%s4 + $0x78] sm:$0xff]
    %v119 = vpack.c.bf16 %v101, %v101
    %v120 = vld [vmem:[%s2] sm:$0xff]
    %v121 = vld [vmem:[%s2 + $0x8] sm:$0xff]
    %v122 = vld [vmem:[%s2 + $0x10] sm:$0xff]
    %v123 = vld [vmem:[%s2 + $0x18] sm:$0xff]
    %v124 = vld [vmem:[%s2 + $0x20] sm:$0xff]
    %v125 = vld [vmem:[%s2 + $0x28] sm:$0xff]
    %v126 = vld [vmem:[%s2 + $0x30] sm:$0xff]
    %v127 = vld [vmem:[%s2 + $0x38] sm:$0xff]
    %v128 = vld [vmem:[%s2 + $0x40] sm:$0xff]
    %v129 = vld [vmem:[%s2 + $0x48] sm:$0xff]
    %v130 = vld [vmem:[%s2 + $0x50] sm:$0xff]
    %v131 = vld [vmem:[%s2 + $0x58] sm:$0xff]
    %v132 = vld [vmem:[%s2 + $0x60] sm:$0xff]
    %v133 = vld [vmem:[%s2 + $0x68] sm:$0xff]
    %v134 = vld [vmem:[%s2 + $0x70] sm:$0xff]
    %v135 = vld [vmem:[%s2 + $0x78] sm:$0xff]
    %v136 = vpack.c.bf16 %v122, %v120
    %v137 = vpack.c.bf16 %v123, %v121
    %v138 = vpack.c.bf16 %v126, %v124
    %v139 = vpack.c.bf16 %v127, %v125
    %v140 = vpack.c.bf16 %v130, %v128
    %v141 = vpack.c.bf16 %v131, %v129
    %v142 = vpack.c.bf16 %v134, %v132
    %v143 = vpack.c.bf16 %v135, %v133
    %v145 = vlaneseq
    %v146 = vshrl.u32 %v145, 7
    %v147 = vsub.s32 0, %v146
    %v148 = vrot.slane %v102, %v147
    %v149 = vlaneseq
    %v150 = vshrl.u32 %v149, 7
    %v151 = vsub.s32 1, %v150
    %v152 = vrot.slane %v102, %v151
    %vm155 = vcmask 523264
    %v157 = vsel %vm155, %v119, 0
    %159 = vmatprep.subr.bf16.mxu0 %v137
    %160 = vmatpush1.bf16.msra.mxu0 %v136
    %161 = vmatprep.subr.bf16.mxu0 %v139
    %162 = vmatpush1.bf16.msra.mxu0 %v138
    %163 = vmatprep.subr.bf16.mxu0 %v141
    %164 = vmatpush1.bf16.msra.mxu0 %v140
    %165 = vmatprep.subr.bf16.mxu0 %v143
    %166 = vmatpush1.bf16.msra.mxu0 %v142
    %167 = vmatprep.subr.bf16.mxu0 0
    %168 = vmatpush1.bf16.msra.mxu0 0
    %169 = vmatprep.subr.bf16.mxu0 0
    %170 = vmatpush1.bf16.msra.mxu0 0
    %171 = vmatprep.subr.bf16.mxu0 0
    %172 = vmatpush1.bf16.msra.mxu0 0
    %173 = vmatprep.subr.bf16.mxu0 0
    %174 = vmatpush1.bf16.msra.mxu0 0
    %175 = vmatprep.subr.bf16.mxu0 0
    %176 = vmatpush1.bf16.msra.mxu0 0
    %177 = vmatprep.subr.bf16.mxu0 0
    %178 = vmatpush1.bf16.msra.mxu0 0
    %179 = vmatprep.subr.bf16.mxu0 0
    %180 = vmatpush1.bf16.msra.mxu0 0
    %181 = vmatprep.subr.bf16.mxu0 0
    %182 = vmatpush1.bf16.msra.mxu0 0
    %183 = vmatprep.subr.bf16.mxu0 0
    %184 = vmatpush1.bf16.msra.mxu0 0
    %185 = vmatprep.subr.bf16.mxu0 0
    %186 = vmatpush1.bf16.msra.mxu0 0
    %187 = vmatprep.subr.bf16.mxu0 0
    %188 = vmatpush1.bf16.msra.mxu0 0
    %189 = vmatprep.subr.bf16.mxu0 0
    %190 = vmatpush1.bf16.msra.mxu0 0
    %191 = vmatprep.mubr.bf16.mxu0 0
    %192 = vmatmul.mubr.bf16.gmra.mrb[0].mxu0 %v157
    %v193 = vpop.f32.mrb[0].mxu0
    %v194 = vadd.f32 %v148, %v193
    %v195 = vpop.f32.mrb[0].mxu0
    %v196 = vadd.f32 %v152, %v195
    %v197 = vpop.f32.mrb[0].mxu0
    %v198 = vpop.f32.mrb[0].mxu0
    %199 = vdwg.mxu0
    %v200 = vpack.c.bf16 %v105, %v103
    %v201 = vpack.c.bf16 %v106, %v104
    %v202 = vpack.c.bf16 %v109, %v107
    %v203 = vpack.c.bf16 %v110, %v108
    %v204 = vpack.c.bf16 %v113, %v111
    %v205 = vpack.c.bf16 %v114, %v112
    %v206 = vpack.c.bf16 %v117, %v115
    %v207 = vpack.c.bf16 %v118, %v116
    %v209 = vsel %vm155, 0, 0
    %211 = vmatprep.subr.bf16.mxu0 %v201
    %212 = vmatpush1.bf16.msra.mxu0 %v200
    %213 = vmatprep.subr.bf16.mxu0 %v203
    %214 = vmatpush1.bf16.msra.mxu0 %v202
    %215 = vmatprep.subr.bf16.mxu0 %v205
    %216 = vmatpush1.bf16.msra.mxu0 %v204
    %217 = vmatprep.subr.bf16.mxu0 %v207
    %218 = vmatpush1.bf16.msra.mxu0 %v206
    %219 = vmatprep.subr.bf16.mxu0 0
    %220 = vmatpush1.bf16.msra.mxu0 0
    %221 = vmatprep.subr.bf16.mxu0 0
    %222 = vmatpush1.bf16.msra.mxu0 0
    %223 = vmatprep.subr.bf16.mxu0 0
    %224 = vmatpush1.bf16.msra.mxu0 0
    %225 = vmatprep.subr.bf16.mxu0 0
    %226 = vmatpush1.bf16.msra.mxu0 0
    %227 = vmatprep.subr.bf16.mxu0 0
    %228 = vmatpush1.bf16.msra.mxu0 0
    %229 = vmatprep.subr.bf16.mxu0 0
    %230 = vmatpush1.bf16.msra.mxu0 0
    %231 = vmatprep.subr.bf16.mxu0 0
    %232 = vmatpush1.bf16.msra.mxu0 0
    %233 = vmatprep.subr.bf16.mxu0 0
    %234 = vmatpush1.bf16.msra.mxu0 0
    %235 = vmatprep.subr.bf16.mxu0 0
    %236 = vmatpush1.bf16.msra.mxu0 0
    %237 = vmatprep.subr.bf16.mxu0 0
    %238 = vmatpush1.bf16.msra.mxu0 0
    %239 = vmatprep.subr.bf16.mxu0 0
    %240 = vmatpush1.bf16.msra.mxu0 0
    %241 = vmatprep.subr.bf16.mxu0 0
    %242 = vmatpush1.bf16.msra.mxu0 0
    %243 = vmatprep.mubr.bf16.mxu0 0
    %244 = vmatmul.mubr.bf16.gmra.mrb[0].mxu0 %v209
    %v245 = vpop.f32.mrb[0].mxu0
    %v246 = vadd.f32 0.0, %v245
    %v247 = vpop.f32.mrb[0].mxu0
    %v248 = vadd.f32 0.0, %v247
    %v249 = vpop.f32.mrb[0].mxu0
    %v250 = vpop.f32.mrb[0].mxu0
    %251 = vdwg.mxu0
    %v254 = vrot.slane %v194, 7
    %v255 = vrot.slane %v196, 7
    %v258 = vsel %vm99, %v194, %v254
    %v259 = vsel %vm100, %v196, %v255
    %v260 = vadd.f32 %v258, %v246
    %v261 = vadd.f32 %v259, %v248
    %v262 = vmul.f32 %v260, 0.5
    %v263 = vmul.f32 %v261, 0.5
    %v264 = vsel %vm95, %v260, %v262
    %v265 = vsel %vm96, %v261, %v263
    %v266 = vtanh.pop %v264
    %v267 = vtanh.pop %v265
    %v268 = vmul.f32 %v266, 0.5
    %v269 = vmul.f32 %v267, 0.5
    %v270 = vadd.f32 %v268, 0.5
    %v271 = vadd.f32 %v269, 0.5
    %v272 = vsel %vm95, %v266, %v270
    %v273 = vsel %vm96, %v267, %v271
    %v274 = vmul.f32 %v272, 0.0
    %v275 = vmul.f32 %v272, %v273
    %277 = vrot.lane.b32.xlu0 %v275, 64
    %v278 = vpop.permute.xlu0 %277
    %v280 = vadd.f32 %v274, %v278
    %v281 = vtanh.pop %v280
    %v282 = vmul.f32 %v273, %v281
    %v283 = vpack.c.bf16 %v282, %v282
    %285 = vrot.lane.b32.xlu0 %v283, 64
    %v286 = vpop.permute.xlu0 %285
    %v288 = vsel %vm155, %v286, 0
    %290 = vmatprep.subr.bf16.mxu0 %v201
    %291 = vmatpush1.bf16.msra.mxu0 %v200
    %292 = vmatprep.subr.bf16.mxu0 %v203
    %293 = vmatpush1.bf16.msra.mxu0 %v202
    %294 = vmatprep.subr.bf16.mxu0 %v205
    %295 = vmatpush1.bf16.msra.mxu0 %v204
    %296 = vmatprep.subr.bf16.mxu0 %v207
    %297 = vmatpush1.bf16.msra.mxu0 %v206
    %298 = vmatprep.subr.bf16.mxu0 0
    %299 = vmatpush1.bf16.msra.mxu0 0
    %300 = vmatprep.subr.bf16.mxu0 0
    %301 = vmatpush1.bf16.msra.mxu0 0
    %302 = vmatprep.subr.bf16.mxu0 0
    %303 = vmatpush1.bf16.msra.mxu0 0
    %304 = vmatprep.subr.bf16.mxu0 0
    %305 = vmatpush1.bf16.msra.mxu0 0
    %306 = vmatprep.subr.bf16.mxu0 0
    %307 = vmatpush1.bf16.msra.mxu0 0
    %308 = vmatprep.subr.bf16.mxu0 0
    %309 = vmatpush1.bf16.msra.mxu0 0
    %310 = vmatprep.subr.bf16.mxu0 0
    %311 = vmatpush1.bf16.msra.mxu0 0
    %312 = vmatprep.subr.bf16.mxu0 0
    %313 = vmatpush1.bf16.msra.mxu0 0
    %314 = vmatprep.subr.bf16.mxu0 0
    %315 = vmatpush1.bf16.msra.mxu0 0
    %316 = vmatprep.subr.bf16.mxu0 0
    %317 = vmatpush1.bf16.msra.mxu0 0
    %318 = vmatprep.subr.bf16.mxu0 0
    %319 = vmatpush1.bf16.msra.mxu0 0
    %320 = vmatprep.subr.bf16.mxu0 0
    %321 = vmatpush1.bf16.msra.mxu0 0
    %322 = vmatprep.mubr.bf16.mxu0 0
    %323 = vmatmul.mubr.bf16.gmra.mrb[0].mxu0 %v288
    %v324 = vpop.f32.mrb[0].mxu0
    %v325 = vadd.f32 0.0, %v324
    %v326 = vpop.f32.mrb[0].mxu0
    %v327 = vadd.f32 0.0, %v326
    %v328 = vpop.f32.mrb[0].mxu0
    %v329 = vpop.f32.mrb[0].mxu0
    %330 = vdwg.mxu0
    %v331 = vrot.slane %v194, 5
    %v332 = vrot.slane %v196, 5
    %v335 = vsel %vm99, %v194, %v331
    %v336 = vsel %vm100, %v196, %v332
    %v339 = vrot.slane %v325, 7
    %v340 = vrot.slane %v327, 7
    %v343 = vadd.f32 %v335, %v339
    %v344 = vadd.f32 %v336, %v340
    %v345 = vmul.f32 %v343, 0.5
    %v346 = vmul.f32 %v344, 0.5
    %v347 = vsel %vm95, %v343, %v345
    %v348 = vsel %vm96, %v344, %v346
    %v349 = vtanh.pop %v347
    %v350 = vtanh.pop %v348
    %v351 = vmul.f32 %v349, 0.5
    %v352 = vmul.f32 %v350, 0.5
    %v353 = vadd.f32 %v351, 0.5
    %v354 = vadd.f32 %v352, 0.5
    %v355 = vsel %vm95, %v349, %v353
    %v356 = vsel %vm96, %v350, %v354
    %v358 = vrot.slane %v280, 7
    %v360 = vmul.f32 %v355, %v358
    %v361 = vmul.f32 %v355, %v356
    %363 = vrot.lane.b32.xlu0 %v361, 64
    %v364 = vpop.permute.xlu0 %363
    %v366 = vadd.f32 %v360, %v364
    %v367 = vtanh.pop %v366
    %v368 = vmul.f32 %v356, %v367
    %v369 = vpack.c.bf16 %v368, %v368
    %v371 = vshrl.u32 %v369, 16
    %373 = vrot.lane.b32.xlu0 %v371, 64
    %v374 = vpop.permute.xlu0 %373
    %v376 = vsel %vm155, %v374, 0
    %378 = vmatprep.subr.bf16.mxu0 %v201
    %379 = vmatpush1.bf16.msra.mxu0 %v200
    %380 = vmatprep.subr.bf16.mxu0 %v203
    %381 = vmatpush1.bf16.msra.mxu0 %v202
    %382 = vmatprep.subr.bf16.mxu0 %v205
    %383 = vmatpush1.bf16.msra.mxu0 %v204
    %384 = vmatprep.subr.bf16.mxu0 %v207
    %385 = vmatpush1.bf16.msra.mxu0 %v206
    %386 = vmatprep.subr.bf16.mxu0 0
    %387 = vmatpush1.bf16.msra.mxu0 0
    %388 = vmatprep.subr.bf16.mxu0 0
    %389 = vmatpush1.bf16.msra.mxu0 0
    %390 = vmatprep.subr.bf16.mxu0 0
    %391 = vmatpush1.bf16.msra.mxu0 0
    %392 = vmatprep.subr.bf16.mxu0 0
    %393 = vmatpush1.bf16.msra.mxu0 0
    %394 = vmatprep.subr.bf16.mxu0 0
    %395 = vmatpush1.bf16.msra.mxu0 0
    %396 = vmatprep.subr.bf16.mxu0 0
    %397 = vmatpush1.bf16.msra.mxu0 0
    %398 = vmatprep.subr.bf16.mxu0 0
    %399 = vmatpush1.bf16.msra.mxu0 0
    %400 = vmatprep.subr.bf16.mxu0 0
    %401 = vmatpush1.bf16.msra.mxu0 0
    %402 = vmatprep.subr.bf16.mxu0 0
    %403 = vmatpush1.bf16.msra.mxu0 0
    %404 = vmatprep.subr.bf16.mxu0 0
    %405 = vmatpush1.bf16.msra.mxu0 0
    %406 = vmatprep.subr.bf16.mxu0 0
    %407 = vmatpush1.bf16.msra.mxu0 0
    %408 = vmatprep.subr.bf16.mxu0 0
    %409 = vmatpush1.bf16.msra.mxu0 0
    %410 = vmatprep.mubr.bf16.mxu0 0
    %411 = vmatmul.mubr.bf16.gmra.mrb[0].mxu0 %v376
    %v412 = vpop.f32.mrb[0].mxu0
    %v413 = vadd.f32 0.0, %v412
    %v414 = vpop.f32.mrb[0].mxu0
    %v415 = vadd.f32 0.0, %v414
    %v416 = vpop.f32.mrb[0].mxu0
    %v417 = vpop.f32.mrb[0].mxu0
    %418 = vdwg.mxu0
    %v419 = vrot.slane %v194, 3
    %v420 = vrot.slane %v196, 3
    %v423 = vsel %vm99, %v194, %v419
    %v424 = vsel %vm100, %v196, %v420
    %v427 = vrot.slane %v413, 6
    %v428 = vrot.slane %v415, 6
    %v431 = vadd.f32 %v423, %v427
    %v432 = vadd.f32 %v424, %v428
    %v433 = vmul.f32 %v431, 0.5
    %v434 = vmul.f32 %v432, 0.5
    %v435 = vsel %vm95, %v431, %v433
    %v436 = vsel %vm96, %v432, %v434
    %v437 = vtanh.pop %v435
    %v438 = vtanh.pop %v436
    %v439 = vmul.f32 %v437, 0.5
    %v440 = vmul.f32 %v438, 0.5
    %v441 = vadd.f32 %v439, 0.5
    %v442 = vadd.f32 %v440, 0.5
    %v443 = vsel %vm95, %v437, %v441
    %v444 = vsel %vm96, %v438, %v442
    %v446 = vrot.slane %v366, 7
    %v448 = vmul.f32 %v443, %v446
    %v449 = vmul.f32 %v443, %v444
    %451 = vrot.lane.b32.xlu0 %v449, 64
    %v452 = vpop.permute.xlu0 %451
    %v454 = vadd.f32 %v448, %v452
    %v455 = vtanh.pop %v454
    %v456 = vmul.f32 %v444, %v455
    %v457 = vpack.c.bf16 %v456, %v456
    %v459 = vrot.slane %v457, 1
    %460 = vrot.lane.b32.xlu0 %v459, 64
    %v461 = vpop.permute.xlu0 %460
    %v463 = vsel %vm155, %v461, 0
    %465 = vmatprep.subr.bf16.mxu0 %v201
    %466 = vmatpush1.bf16.msra.mxu0 %v200
    %467 = vmatprep.subr.bf16.mxu0 %v203
    %468 = vmatpush1.bf16.msra.mxu0 %v202
    %469 = vmatprep.subr.bf16.mxu0 %v205
    %470 = vmatpush1.bf16.msra.mxu0 %v204
    %471 = vmatprep.subr.bf16.mxu0 %v207
    %472 = vmatpush1.bf16.msra.mxu0 %v206
    %473 = vmatprep.subr.bf16.mxu0 0
    %474 = vmatpush1.bf16.msra.mxu0 0
    %475 = vmatprep.subr.bf16.mxu0 0
    %476 = vmatpush1.bf16.msra.mxu0 0
    %477 = vmatprep.subr.bf16.mxu0 0
    %478 = vmatpush1.bf16.msra.mxu0 0
    %479 = vmatprep.subr.bf16.mxu0 0
    %480 = vmatpush1.bf16.msra.mxu0 0
    %481 = vmatprep.subr.bf16.mxu0 0
    %482 = vmatpush1.bf16.msra.mxu0 0
    %483 = vmatprep.subr.bf16.mxu0 0
    %484 = vmatpush1.bf16.msra.mxu0 0
    %485 = vmatprep.subr.bf16.mxu0 0
    %486 = vmatpush1.bf16.msra.mxu0 0
    %487 = vmatprep.subr.bf16.mxu0 0
    %488 = vmatpush1.bf16.msra.mxu0 0
    %489 = vmatprep.subr.bf16.mxu0 0
    %490 = vmatpush1.bf16.msra.mxu0 0
    %491 = vmatprep.subr.bf16.mxu0 0
    %492 = vmatpush1.bf16.msra.mxu0 0
    %493 = vmatprep.subr.bf16.mxu0 0
    %494 = vmatpush1.bf16.msra.mxu0 0
    %495 = vmatprep.subr.bf16.mxu0 0
    %496 = vmatpush1.bf16.msra.mxu0 0
    %497 = vmatprep.mubr.bf16.mxu0 0
    %498 = vmatmul.mubr.bf16.gmra.mrb[0].mxu0 %v463
    %v499 = vpop.f32.mrb[0].mxu0
    %v500 = vadd.f32 0.0, %v499
    %v501 = vpop.f32.mrb[0].mxu0
    %v502 = vadd.f32 0.0, %v501
    %v503 = vpop.f32.mrb[0].mxu0
    %v504 = vpop.f32.mrb[0].mxu0
    %505 = vdwg.mxu0
    %v506 = vrot.slane %v194, 1
    %v507 = vrot.slane %v196, 1
    %v510 = vsel %vm99, %v194, %v506
    %v511 = vsel %vm100, %v196, %v507
    %v514 = vrot.slane %v500, 5
    %v515 = vrot.slane %v502, 5
    %v518 = vadd.f32 %v510, %v514
    %v519 = vadd.f32 %v511, %v515
    %v520 = vmul.f32 %v518, 0.5
    %v521 = vmul.f32 %v519, 0.5
    %v522 = vsel %vm95, %v518, %v520
    %v523 = vsel %vm96, %v519, %v521
    %v524 = vtanh.pop %v522
    %v525 = vtanh.pop %v523
    %v526 = vmul.f32 %v524, 0.5
    %v527 = vmul.f32 %v525, 0.5
    %v528 = vadd.f32 %v526, 0.5
    %v529 = vadd.f32 %v527, 0.5
    %v530 = vsel %vm95, %v524, %v528
    %v531 = vsel %vm96, %v525, %v529
    %v533 = vrot.slane %v454, 7
    %v535 = vmul.f32 %v530, %v533
    %v536 = vmul.f32 %v530, %v531
    %538 = vrot.lane.b32.xlu0 %v536, 64
    %v539 = vpop.permute.xlu0 %538
    %v541 = vadd.f32 %v535, %v539
    %v542 = vtanh.pop %v541
    %v543 = vmul.f32 %v531, %v542
    %v544 = vpack.c.bf16 %v543, %v543
    %v546 = vshrl.u32 %v544, 16
    %v548 = vrot.slane %v546, 1
    %549 = vrot.lane.b32.xlu0 %v548, 64
    %v550 = vpop.permute.xlu0 %549
    %v552 = vsel %vm155, %v550, 0
    %554 = vmatprep.subr.bf16.mxu0 %v201
    %555 = vmatpush1.bf16.msra.mxu0 %v200
    %556 = vmatprep.subr.bf16.mxu0 %v203
    %557 = vmatpush1.bf16.msra.mxu0 %v202
    %558 = vmatprep.subr.bf16.mxu0 %v205
    %559 = vmatpush1.bf16.msra.mxu0 %v204
    %560 = vmatprep.subr.bf16.mxu0 %v207
    %561 = vmatpush1.bf16.msra.mxu0 %v206
    %562 = vmatprep.subr.bf16.mxu0 0
    %563 = vmatpush1.bf16.msra.mxu0 0
    %564 = vmatprep.subr.bf16.mxu0 0
    %565 = vmatpush1.bf16.msra.mxu0 0
    %566 = vmatprep.subr.bf16.mxu0 0
    %567 = vmatpush1.bf16.msra.mxu0 0
    %568 = vmatprep.subr.bf16.mxu0 0
    %569 = vmatpush1.bf16.msra.mxu0 0
    %570 = vmatprep.subr.bf16.mxu0 0
    %571 = vmatpush1.bf16.msra.mxu0 0
    %572 = vmatprep.subr.bf16.mxu0 0
    %573 = vmatpush1.bf16.msra.mxu0 0
    %574 = vmatprep.subr.bf16.mxu0 0
    %575 = vmatpush1.bf16.msra.mxu0 0
    %576 = vmatprep.subr.bf16.mxu0 0
    %577 = vmatpush1.bf16.msra.mxu0 0
    %578 = vmatprep.subr.bf16.mxu0 0
    %579 = vmatpush1.bf16.msra.mxu0 0
    %580 = vmatprep.subr.bf16.mxu0 0
    %581 = vmatpush1.bf16.msra.mxu0 0
    %582 = vmatprep.subr.bf16.mxu0 0
    %583 = vmatpush1.bf16.msra.mxu0 0
    %584 = vmatprep.subr.bf16.mxu0 0
    %585 = vmatpush1.bf16.msra.mxu0 0
    %586 = vmatprep.mubr.bf16.mxu0 0
    %587 = vmatmul.mubr.bf16.gmra.mrb[0].mxu0 %v552
    %v588 = vpop.f32.mrb[0].mxu0
    %v589 = vadd.f32 0.0, %v588
    %v590 = vpop.f32.mrb[0].mxu0
    %v591 = vadd.f32 0.0, %v590
    %v592 = vpop.f32.mrb[0].mxu0
    %v593 = vpop.f32.mrb[0].mxu0
    %594 = vdwg.mxu0
    %v597 = vrot.slane %v589, 4
    %v598 = vrot.slane %v591, 4
    %v601 = vadd.f32 %v258, %v597
    %v602 = vadd.f32 %v259, %v598
    %v603 = vmul.f32 %v601, 0.5
    %v604 = vmul.f32 %v602, 0.5
    %v605 = vsel %vm95, %v601, %v603
    %v606 = vsel %vm96, %v602, %v604
    %v607 = vtanh.pop %v605
    %v608 = vtanh.pop %v606
    %v609 = vmul.f32 %v607, 0.5
    %v610 = vmul.f32 %v608, 0.5
    %v611 = vadd.f32 %v609, 0.5
    %v612 = vadd.f32 %v610, 0.5
    %v613 = vsel %vm95, %v607, %v611
    %v614 = vsel %vm96, %v608, %v612
    %v616 = vrot.slane %v541, 7
    %v618 = vmul.f32 %v613, %v616
    %v619 = vmul.f32 %v613, %v614
    %621 = vrot.lane.b32.xlu0 %v619, 64
    %v622 = vpop.permute.xlu0 %621
    %v624 = vadd.f32 %v618, %v622
    %v625 = vtanh.pop %v624
    %v626 = vmul.f32 %v614, %v625
    %v627 = vpack.c.bf16 %v626, %v626
    %v629 = vrot.slane %v627, 2
    %630 = vrot.lane.b32.xlu0 %v629, 64
    %v631 = vpop.permute.xlu0 %630
    %v633 = vsel %vm155, %v631, 0
    %635 = vmatprep.subr.bf16.mxu0 %v201
    %636 = vmatpush1.bf16.msra.mxu0 %v200
    %637 = vmatprep.subr.bf16.mxu0 %v203
    %638 = vmatpush1.bf16.msra.mxu0 %v202
    %639 = vmatprep.subr.bf16.mxu0 %v205
    %640 = vmatpush1.bf16.msra.mxu0 %v204
    %641 = vmatprep.subr.bf16.mxu0 %v207
    %642 = vmatpush1.bf16.msra.mxu0 %v206
    %643 = vmatprep.subr.bf16.mxu0 0
    %644 = vmatpush1.bf16.msra.mxu0 0
    %645 = vmatprep.subr.bf16.mxu0 0
    %646 = vmatpush1.bf16.msra.mxu0 0
    %647 = vmatprep.subr.bf16.mxu0 0
    %648 = vmatpush1.bf16.msra.mxu0 0
    %649 = vmatprep.subr.bf16.mxu0 0
    %650 = vmatpush1.bf16.msra.mxu0 0
    %651 = vmatprep.subr.bf16.mxu0 0
    %652 = vmatpush1.bf16.msra.mxu0 0
    %653 = vmatprep.subr.bf16.mxu0 0
    %654 = vmatpush1.bf16.msra.mxu0 0
    %655 = vmatprep.subr.bf16.mxu0 0
    %656 = vmatpush1.bf16.msra.mxu0 0
    %657 = vmatprep.subr.bf16.mxu0 0
    %658 = vmatpush1.bf16.msra.mxu0 0
    %659 = vmatprep.subr.bf16.mxu0 0
    %660 = vmatpush1.bf16.msra.mxu0 0
    %661 = vmatprep.subr.bf16.mxu0 0
    %662 = vmatpush1.bf16.msra.mxu0 0
    %663 = vmatprep.subr.bf16.mxu0 0
    %664 = vmatpush1.bf16.msra.mxu0 0
    %665 = vmatprep.subr.bf16.mxu0 0
    %666 = vmatpush1.bf16.msra.mxu0 0
    %667 = vmatprep.mubr.bf16.mxu0 0
    %668 = vmatmul.mubr.bf16.gmra.mrb[0].mxu0 %v633
    %v669 = vpop.f32.mrb[0].mxu0
    %v670 = vadd.f32 0.0, %v669
    %v671 = vpop.f32.mrb[0].mxu0
    %v672 = vadd.f32 0.0, %v671
    %v673 = vpop.f32.mrb[0].mxu0
    %v674 = vpop.f32.mrb[0].mxu0
    %675 = vdwg.mxu0
    %v678 = vrot.slane %v670, 3
    %v679 = vrot.slane %v672, 3
    %v682 = vadd.f32 %v335, %v678
    %v683 = vadd.f32 %v336, %v679
    %v684 = vmul.f32 %v682, 0.5
    %v685 = vmul.f32 %v683, 0.5
    %v686 = vsel %vm95, %v682, %v684
    %v687 = vsel %vm96, %v683, %v685
    %v688 = vtanh.pop %v686
    %v689 = vtanh.pop %v687
    %v690 = vmul.f32 %v688, 0.5
    %v691 = vmul.f32 %v689, 0.5
    %v692 = vadd.f32 %v690, 0.5
    %v693 = vadd.f32 %v691, 0.5
    %v694 = vsel %vm95, %v688, %v692
    %v695 = vsel %vm96, %v689, %v693
    %v697 = vrot.slane %v624, 7
    %v699 = vmul.f32 %v694, %v697
    %v700 = vmul.f32 %v694, %v695
    %702 = vrot.lane.b32.xlu0 %v700, 64
    %v703 = vpop.permute.xlu0 %702
    %v705 = vadd.f32 %v699, %v703
    %v706 = vtanh.pop %v705
    %v707 = vmul.f32 %v695, %v706
    %v708 = vpack.c.bf16 %v707, %v707
    %v710 = vshrl.u32 %v708, 16
    %v712 = vrot.slane %v710, 2
    %713 = vrot.lane.b32.xlu0 %v712, 64
    %v714 = vpop.permute.xlu0 %713
    %v716 = vsel %vm155, %v714, 0
    %718 = vmatprep.subr.bf16.mxu0 %v201
    %719 = vmatpush1.bf16.msra.mxu0 %v200
    %720 = vmatprep.subr.bf16.mxu0 %v203
    %721 = vmatpush1.bf16.msra.mxu0 %v202
    %722 = vmatprep.subr.bf16.mxu0 %v205
    %723 = vmatpush1.bf16.msra.mxu0 %v204
    %724 = vmatprep.subr.bf16.mxu0 %v207
    %725 = vmatpush1.bf16.msra.mxu0 %v206
    %726 = vmatprep.subr.bf16.mxu0 0
    %727 = vmatpush1.bf16.msra.mxu0 0
    %728 = vmatprep.subr.bf16.mxu0 0
    %729 = vmatpush1.bf16.msra.mxu0 0
    %730 = vmatprep.subr.bf16.mxu0 0
    %731 = vmatpush1.bf16.msra.mxu0 0
    %732 = vmatprep.subr.bf16.mxu0 0
    %733 = vmatpush1.bf16.msra.mxu0 0
    %734 = vmatprep.subr.bf16.mxu0 0
    %735 = vmatpush1.bf16.msra.mxu0 0
    %736 = vmatprep.subr.bf16.mxu0 0
    %737 = vmatpush1.bf16.msra.mxu0 0
    %738 = vmatprep.subr.bf16.mxu0 0
    %739 = vmatpush1.bf16.msra.mxu0 0
    %740 = vmatprep.subr.bf16.mxu0 0
    %741 = vmatpush1.bf16.msra.mxu0 0
    %742 = vmatprep.subr.bf16.mxu0 0
    %743 = vmatpush1.bf16.msra.mxu0 0
    %744 = vmatprep.subr.bf16.mxu0 0
    %745 = vmatpush1.bf16.msra.mxu0 0
    %746 = vmatprep.subr.bf16.mxu0 0
    %747 = vmatpush1.bf16.msra.mxu0 0
    %748 = vmatprep.subr.bf16.mxu0 0
    %749 = vmatpush1.bf16.msra.mxu0 0
    %750 = vmatprep.mubr.bf16.mxu0 0
    %751 = vmatmul.mubr.bf16.gmra.mrb[0].mxu0 %v716
    %v752 = vpop.f32.mrb[0].mxu0
    %v753 = vadd.f32 0.0, %v752
    %v754 = vpop.f32.mrb[0].mxu0
    %v755 = vadd.f32 0.0, %v754
    %v756 = vpop.f32.mrb[0].mxu0
    %v757 = vpop.f32.mrb[0].mxu0
    %758 = vdwg.mxu0
    %v761 = vrot.slane %v753, 2
    %v762 = vrot.slane %v755, 2
    %v765 = vadd.f32 %v423, %v761
    %v766 = vadd.f32 %v424, %v762
    %v767 = vmul.f32 %v765, 0.5
    %v768 = vmul.f32 %v766, 0.5
    %v769 = vsel %vm95, %v765, %v767
    %v770 = vsel %vm96, %v766, %v768
    %v771 = vtanh.pop %v769
    %v772 = vtanh.pop %v770
    %v773 = vmul.f32 %v771, 0.5
    %v774 = vmul.f32 %v772, 0.5
    %v775 = vadd.f32 %v773, 0.5
    %v776 = vadd.f32 %v774, 0.5
    %v777 = vsel %vm95, %v771, %v775
    %v778 = vsel %vm96, %v772, %v776
    %v780 = vrot.slane %v705, 7
    %v782 = vmul.f32 %v777, %v780
    %v783 = vmul.f32 %v777, %v778
    %785 = vrot.lane.b32.xlu0 %v783, 64
    %v786 = vpop.permute.xlu0 %785
    %v788 = vadd.f32 %v782, %v786
    %v789 = vtanh.pop %v788
    %v790 = vmul.f32 %v778, %v789
    %v791 = vpack.c.bf16 %v790, %v790
    %v793 = vrot.slane %v791, 3
    %794 = vrot.lane.b32.xlu0 %v793, 64
    %v795 = vpop.permute.xlu0 %794
    %v797 = vsel %vm155, %v795, 0
    %799 = vmatprep.subr.bf16.mxu0 %v201
    %800 = vmatpush1.bf16.msra.mxu0 %v200
    %801 = vmatprep.subr.bf16.mxu0 %v203
    %802 = vmatpush1.bf16.msra.mxu0 %v202
    %803 = vmatprep.subr.bf16.mxu0 %v205
    %804 = vmatpush1.bf16.msra.mxu0 %v204
    %805 = vmatprep.subr.bf16.mxu0 %v207
    %806 = vmatpush1.bf16.msra.mxu0 %v206
    %807 = vmatprep.subr.bf16.mxu0 0
    %808 = vmatpush1.bf16.msra.mxu0 0
    %809 = vmatprep.subr.bf16.mxu0 0
    %810 = vmatpush1.bf16.msra.mxu0 0
    %811 = vmatprep.subr.bf16.mxu0 0
    %812 = vmatpush1.bf16.msra.mxu0 0
    %813 = vmatprep.subr.bf16.mxu0 0
    %814 = vmatpush1.bf16.msra.mxu0 0
    %815 = vmatprep.subr.bf16.mxu0 0
    %816 = vmatpush1.bf16.msra.mxu0 0
    %817 = vmatprep.subr.bf16.mxu0 0
    %818 = vmatpush1.bf16.msra.mxu0 0
    %819 = vmatprep.subr.bf16.mxu0 0
    %820 = vmatpush1.bf16.msra.mxu0 0
    %821 = vmatprep.subr.bf16.mxu0 0
    %822 = vmatpush1.bf16.msra.mxu0 0
    %823 = vmatprep.subr.bf16.mxu0 0
    %824 = vmatpush1.bf16.msra.mxu0 0
    %825 = vmatprep.subr.bf16.mxu0 0
    %826 = vmatpush1.bf16.msra.mxu0 0
    %827 = vmatprep.subr.bf16.mxu0 0
    %828 = vmatpush1.bf16.msra.mxu0 0
    %829 = vmatprep.subr.bf16.mxu0 0
    %830 = vmatpush1.bf16.msra.mxu0 0
    %831 = vmatprep.mubr.bf16.mxu0 0
    %832 = vmatmul.mubr.bf16.gmra.mrb[0].mxu0 %v797
    %v833 = vpop.f32.mrb[0].mxu0
    %v834 = vadd.f32 0.0, %v833
    %v835 = vpop.f32.mrb[0].mxu0
    %v836 = vadd.f32 0.0, %v835
    %v837 = vpop.f32.mrb[0].mxu0
    %v838 = vpop.f32.mrb[0].mxu0
    %839 = vdwg.mxu0
    %v842 = vrot.slane %v834, 1
    %v843 = vrot.slane %v836, 1
    %v846 = vadd.f32 %v510, %v842
    %v847 = vadd.f32 %v511, %v843
    %v848 = vmul.f32 %v846, 0.5
    %v849 = vmul.f32 %v847, 0.5
    %v850 = vsel %vm95, %v846, %v848
    %v851 = vsel %vm96, %v847, %v849
    %v852 = vtanh.pop %v850
    %v853 = vtanh.pop %v851
    %v854 = vmul.f32 %v852, 0.5
    %v855 = vmul.f32 %v853, 0.5
    %v856 = vadd.f32 %v854, 0.5
    %v857 = vadd.f32 %v855, 0.5
    %v858 = vsel %vm95, %v852, %v856
    %v859 = vsel %vm96, %v853, %v857
    %v861 = vrot.slane %v788, 7
    %v863 = vmul.f32 %v858, %v861
    %v864 = vmul.f32 %v858, %v859
    %866 = vrot.lane.b32.xlu0 %v864, 64
    %v867 = vpop.permute.xlu0 %866
    %v869 = vadd.f32 %v863, %v867
    %v870 = vtanh.pop %v869
    %v871 = vmul.f32 %v859, %v870
    %vm872 = vcmask 1040384
    %v873 = vsel %vm872, %v282, %v368
    %vm874 = vcmask 1041408
    %v875 = vsel %vm874, %v873, %v456
    %vm876 = vcmask 1042432
    %v877 = vsel %vm876, %v875, %v543
    %vm878 = vcmask 1043456
    %v879 = vsel %vm878, %v877, %v626
    %vm880 = vcmask 1044480
    %v881 = vsel %vm880, %v879, %v707
    %vm882 = vcmask 1045504
    %v883 = vsel %vm882, %v881, %v790
    %vm884 = vcmask 1046528
    %v885 = vsel %vm884, %v883, %v871
    %v887 = vrot.slane %v871, 7
    %v890 = vrot.slane %v790, 5
    %v893 = vrot.slane %v707, 3
    %v896 = vrot.slane %v626, 1
    %v899 = vrot.slane %v543, 7
    %v902 = vrot.slane %v456, 5
    %v905 = vrot.slane %v368, 3
    %v908 = vrot.slane %v282, 1
    %v910 = vsel %vm872, %v887, %v890
    %v911 = vsel %vm874, %v910, %v893
    %v912 = vsel %vm876, %v911, %v896
    %v913 = vsel %vm878, %v912, %v899
    %v914 = vsel %vm880, %v913, %v902
    %v915 = vsel %vm882, %v914, %v905
    %v916 = vsel %vm884, %v915, %v908
    %vm917 = vcmp.lt.s32.totalorder %v89, 32
    %919 = vrot.lane.b32.xlu0 %v885, 64
    %v920 = vpop.permute.xlu0 %919
    %923 = vrot.lane.b32.xlu0 %v916, 64
    %v924 = vpop.permute.xlu0 %923
    %v926 = vsel %vm917, %v920, %v924
    %s927 = scalar_lea.vmem %s5, 1
    %v928 = vld [vmem:[%s927] ss:$2 sm:$0x3]
    %s929 = scalar_lea.vmem %s4, 128
    %v930 = vld [vmem:[%s929] sm:$0xff]
    %v931 = vld [vmem:[%s929 + $0x8] sm:$0xff]
    %v932 = vld [vmem:[%s929 + $0x10] sm:$0xff]
    %v933 = vld [vmem:[%s929 + $0x18] sm:$0xff]
    %v934 = vld [vmem:[%s929 + $0x20] sm:$0xff]
    %v935 = vld [vmem:[%s929 + $0x28] sm:$0xff]
    %v936 = vld [vmem:[%s929 + $0x30] sm:$0xff]
    %v937 = vld [vmem:[%s929 + $0x38] sm:$0xff]
    %v938 = vld [vmem:[%s929 + $0x40] sm:$0xff]
    %v939 = vld [vmem:[%s929 + $0x48] sm:$0xff]
    %v940 = vld [vmem:[%s929 + $0x50] sm:$0xff]
    %v941 = vld [vmem:[%s929 + $0x58] sm:$0xff]
    %v942 = vld [vmem:[%s929 + $0x60] sm:$0xff]
    %v943 = vld [vmem:[%s929 + $0x68] sm:$0xff]
    %v944 = vld [vmem:[%s929 + $0x70] sm:$0xff]
    %v945 = vld [vmem:[%s929 + $0x78] sm:$0xff]
    %v946 = vpack.c.bf16 %v926, %v926
    %v947 = vld [vmem:[#allocation2] sm:$0xff]
    %v948 = vld [vmem:[#allocation2 + $0x8] sm:$0xff]
    %v949 = vld [vmem:[#allocation2 + $0x10] sm:$0xff]
    %v950 = vld [vmem:[#allocation2 + $0x18] sm:$0xff]
    %v951 = vld [vmem:[#allocation2 + $0x20] sm:$0xff]
    %v952 = vld [vmem:[#allocation2 + $0x28] sm:$0xff]
    %v953 = vld [vmem:[#allocation2 + $0x30] sm:$0xff]
    %v954 = vld [vmem:[#allocation2 + $0x38] sm:$0xff]
    %v955 = vld [vmem:[#allocation2 + $0x40] sm:$0xff]
    %v956 = vld [vmem:[#allocation2 + $0x48] sm:$0xff]
    %v957 = vld [vmem:[#allocation2 + $0x50] sm:$0xff]
    %v958 = vld [vmem:[#allocation2 + $0x58] sm:$0xff]
    %v959 = vld [vmem:[#allocation2 + $0x60] sm:$0xff]
    %v960 = vld [vmem:[#allocation2 + $0x68] sm:$0xff]
    %v961 = vld [vmem:[#allocation2 + $0x70] sm:$0xff]
    %v962 = vld [vmem:[#allocation2 + $0x78] sm:$0xff]
    %v963 = vpack.c.bf16 %v949, %v947
    %v964 = vpack.c.bf16 %v950, %v948
    %v965 = vpack.c.bf16 %v953, %v951
    %v966 = vpack.c.bf16 %v954, %v952
    %v967 = vpack.c.bf16 %v957, %v955
    %v968 = vpack.c.bf16 %v958, %v956
    %v969 = vpack.c.bf16 %v961, %v959
    %v970 = vpack.c.bf16 %v962, %v960
    %v972 = vlaneseq
    %v973 = vshrl.u32 %v972, 7
    %v974 = vsub.s32 0, %v973
    %v975 = vrot.slane %v928, %v974
    %v976 = vlaneseq
    %v977 = vshrl.u32 %v976, 7
    %v978 = vsub.s32 1, %v977
    %v979 = vrot.slane %v928, %v978
    %v983 = vsel %vm155, %v946, 0
    %985 = vmatprep.subr.bf16.mxu0 %v964
    %986 = vmatpush1.bf16.msra.mxu0 %v963
    %987 = vmatprep.subr.bf16.mxu0 %v966
    %988 = vmatpush1.bf16.msra.mxu0 %v965
    %989 = vmatprep.subr.bf16.mxu0 %v968
    %990 = vmatpush1.bf16.msra.mxu0 %v967
    %991 = vmatprep.subr.bf16.mxu0 %v970
    %992 = vmatpush1.bf16.msra.mxu0 %v969
    %993 = vmatprep.subr.bf16.mxu0 0
    %994 = vmatpush1.bf16.msra.mxu0 0
    %995 = vmatprep.subr.bf16.mxu0 0
    %996 = vmatpush1.bf16.msra.mxu0 0
    %997 = vmatprep.subr.bf16.mxu0 0
    %998 = vmatpush1.bf16.msra.mxu0 0
    %999 = vmatprep.subr.bf16.mxu0 0
    %1000 = vmatpush1.bf16.msra.mxu0 0
    %1001 = vmatprep.subr.bf16.mxu0 0
    %1002 = vmatpush1.bf16.msra.mxu0 0
    %1003 = vmatprep.subr.bf16.mxu0 0
    %1004 = vmatpush1.bf16.msra.mxu0 0
    %1005 = vmatprep.subr.bf16.mxu0 0
    %1006 = vmatpush1.bf16.msra.mxu0 0
    %1007 = vmatprep.subr.bf16.mxu0 0
    %1008 = vmatpush1.bf16.msra.mxu0 0
    %1009 = vmatprep.subr.bf16.mxu0 0
    %1010 = vmatpush1.bf16.msra.mxu0 0
    %1011 = vmatprep.subr.bf16.mxu0 0
    %1012 = vmatpush1.bf16.msra.mxu0 0
    %1013 = vmatprep.subr.bf16.mxu0 0
    %1014 = vmatpush1.bf16.msra.mxu0 0
    %1015 = vmatprep.subr.bf16.mxu0 0
    %1016 = vmatpush1.bf16.msra.mxu0 0
    %1017 = vmatprep.mubr.bf16.mxu0 0
    %1018 = vmatmul.mubr.bf16.gmra.mrb[0].mxu0 %v983
    %v1019 = vpop.f32.mrb[0].mxu0
    %v1020 = vadd.f32 %v975, %v1019
    %v1021 = vpop.f32.mrb[0].mxu0
    %v1022 = vadd.f32 %v979, %v1021
    %v1023 = vpop.f32.mrb[0].mxu0
    %v1024 = vpop.f32.mrb[0].mxu0
    %1025 = vdwg.mxu0
    %v1026 = vpack.c.bf16 %v932, %v930
    %v1027 = vpack.c.bf16 %v933, %v931
    %v1028 = vpack.c.bf16 %v936, %v934
    %v1029 = vpack.c.bf16 %v937, %v935
    %v1030 = vpack.c.bf16 %v940, %v938
    %v1031 = vpack.c.bf16 %v941, %v939
    %v1032 = vpack.c.bf16 %v944, %v942
    %v1033 = vpack.c.bf16 %v945, %v943
    %1034 = vmatprep.subr.bf16.mxu0 %v1027
    %1035 = vmatpush1.bf16.msra.mxu0 %v1026
    %1036 = vmatprep.subr.bf16.mxu0 %v1029
    %1037 = vmatpush1.bf16.msra.mxu0 %v1028
    %1038 = vmatprep.subr.bf16.mxu0 %v1031
    %1039 = vmatpush1.bf16.msra.mxu0 %v1030
    %1040 = vmatprep.subr.bf16.mxu0 %v1033
    %1041 = vmatpush1.bf16.msra.mxu0 %v1032
    %1042 = vmatprep.subr.bf16.mxu0 0
    %1043 = vmatpush1.bf16.msra.mxu0 0
    %1044 = vmatprep.subr.bf16.mxu0 0
    %1045 = vmatpush1.bf16.msra.mxu0 0
    %1046 = vmatprep.subr.bf16.mxu0 0
    %1047 = vmatpush1.bf16.msra.mxu0 0
    %1048 = vmatprep.subr.bf16.mxu0 0
    %1049 = vmatpush1.bf16.msra.mxu0 0
    %1050 = vmatprep.subr.bf16.mxu0 0
    %1051 = vmatpush1.bf16.msra.mxu0 0
    %1052 = vmatprep.subr.bf16.mxu0 0
    %1053 = vmatpush1.bf16.msra.mxu0 0
    %1054 = vmatprep.subr.bf16.mxu0 0
    %1055 = vmatpush1.bf16.msra.mxu0 0
    %1056 = vmatprep.subr.bf16.mxu0 0
    %1057 = vmatpush1.bf16.msra.mxu0 0
    %1058 = vmatprep.subr.bf16.mxu0 0
    %1059 = vmatpush1.bf16.msra.mxu0 0
    %1060 = vmatprep.subr.bf16.mxu0 0
    %1061 = vmatpush1.bf16.msra.mxu0 0
    %1062 = vmatprep.subr.bf16.mxu0 0
    %1063 = vmatpush1.bf16.msra.mxu0 0
    %1064 = vmatprep.subr.bf16.mxu0 0
    %1065 = vmatpush1.bf16.msra.mxu0 0
    %1066 = vmatprep.mubr.bf16.mxu0 0
    %1067 = vmatmul.mubr.bf16.gmra.mrb[0].mxu0 %v209
    %v1068 = vpop.f32.mrb[0].mxu0
    %v1069 = vadd.f32 0.0, %v1068
    %v1070 = vpop.f32.mrb[0].mxu0
    %v1071 = vadd.f32 0.0, %v1070
    %v1072 = vpop.f32.mrb[0].mxu0
    %v1073 = vpop.f32.mrb[0].mxu0
    %1074 = vdwg.mxu0
    %v1077 = vrot.slane %v1020, 7
    %v1078 = vrot.slane %v1022, 7
    %v1081 = vsel %vm99, %v1020, %v1077
    %v1082 = vsel %vm100, %v1022, %v1078
    %v1083 = vadd.f32 %v1081, %v1069
    %v1084 = vadd.f32 %v1082, %v1071
    %v1085 = vmul.f32 %v1083, 0.5
    %v1086 = vmul.f32 %v1084, 0.5
    %v1087 = vsel %vm95, %v1083, %v1085
    %v1088 = vsel %vm96, %v1084, %v1086
    %v1089 = vtanh.pop %v1087
    %v1090 = vtanh.pop %v1088
    %v1091 = vmul.f32 %v1089, 0.5
    %v1092 = vmul.f32 %v1090, 0.5
    %v1093 = vadd.f32 %v1091, 0.5
    %v1094 = vadd.f32 %v1092, 0.5
    %v1095 = vsel %vm95, %v1089, %v1093
    %v1096 = vsel %vm96, %v1090, %v1094
    %v1097 = vmul.f32 %v1095, 0.0
    %v1098 = vmul.f32 %v1095, %v1096
    %1100 = vrot.lane.b32.xlu0 %v1098, 64
    %v1101 = vpop.permute.xlu0 %1100
    %v1103 = vadd.f32 %v1097, %v1101
    %v1104 = vtanh.pop %v1103
    %v1105 = vmul.f32 %v1096, %v1104
    %v1106 = vpack.c.bf16 %v1105, %v1105
    %1108 = vrot.lane.b32.xlu0 %v1106, 64
    %v1109 = vpop.permute.xlu0 %1108
    %v1111 = vsel %vm155, %v1109, 0
    %1113 = vmatprep.subr.bf16.mxu0 %v1027
    %1114 = vmatpush1.bf16.msra.mxu0 %v1026
    %1115 = vmatprep.subr.bf16.mxu0 %v1029
    %1116 = vmatpush1.bf16.msra.mxu0 %v1028
    %1117 = vmatprep.subr.bf16.mxu0 %v1031
    %1118 = vmatpush1.bf16.msra.mxu0 %v1030
    %1119 = vmatprep.subr.bf16.mxu0 %v1033
    %1120 = vmatpush1.bf16.msra.mxu0 %v1032
    %1121 = vmatprep.subr.bf16.mxu0 0
    %1122 = vmatpush1.bf16.msra.mxu0 0
    %1123 = vmatprep.subr.bf16.mxu0 0
    %1124 = vmatpush1.bf16.msra.mxu0 0
    %1125 = vmatprep.subr.bf16.mxu0 0
    %1126 = vmatpush1.bf16.msra.mxu0 0
    %1127 = vmatprep.subr.bf16.mxu0 0
    %1128 = vmatpush1.bf16.msra.mxu0 0
    %1129 = vmatprep.subr.bf16.mxu0 0
    %1130 = vmatpush1.bf16.msra.mxu0 0
    %1131 = vmatprep.subr.bf16.mxu0 0
    %1132 = vmatpush1.bf16.msra.mxu0 0
    %1133 = vmatprep.subr.bf16.mxu0 0
    %1134 = vmatpush1.bf16.msra.mxu0 0
    %1135 = vmatprep.subr.bf16.mxu0 0
    %1136 = vmatpush1.bf16.msra.mxu0 0
    %1137 = vmatprep.subr.bf16.mxu0 0
    %1138 = vmatpush1.bf16.msra.mxu0 0
    %1139 = vmatprep.subr.bf16.mxu0 0
    %1140 = vmatpush1.bf16.msra.mxu0 0
    %1141 = vmatprep.subr.bf16.mxu0 0
    %1142 = vmatpush1.bf16.msra.mxu0 0
    %1143 = vmatprep.subr.bf16.mxu0 0
    %1144 = vmatpush1.bf16.msra.mxu0 0
    %1145 = vmatprep.mubr.bf16.mxu0 0
    %1146 = vmatmul.mubr.bf16.gmra.mrb[0].mxu0 %v1111
    %v1147 = vpop.f32.mrb[0].mxu0
    %v1148 = vadd.f32 0.0, %v1147
    %v1149 = vpop.f32.mrb[0].mxu0
    %v1150 = vadd.f32 0.0, %v1149
    %v1151 = vpop.f32.mrb[0].mxu0
    %v1152 = vpop.f32.mrb[0].mxu0
    %1153 = vdwg.mxu0
    %v1154 = vrot.slane %v1020, 5
    %v1155 = vrot.slane %v1022, 5
    %v1158 = vsel %vm99, %v1020, %v1154
    %v1159 = vsel %vm100, %v1022, %v1155
    %v1162 = vrot.slane %v1148, 7
    %v1163 = vrot.slane %v1150, 7
    %v1166 = vadd.f32 %v1158, %v1162
    %v1167 = vadd.f32 %v1159, %v1163
    %v1168 = vmul.f32 %v1166, 0.5
    %v1169 = vmul.f32 %v1167, 0.5
    %v1170 = vsel %vm95, %v1166, %v1168
    %v1171 = vsel %vm96, %v1167, %v1169
    %v1172 = vtanh.pop %v1170
    %v1173 = vtanh.pop %v1171
    %v1174 = vmul.f32 %v1172, 0.5
    %v1175 = vmul.f32 %v1173, 0.5
    %v1176 = vadd.f32 %v1174, 0.5
    %v1177 = vadd.f32 %v1175, 0.5
    %v1178 = vsel %vm95, %v1172, %v1176
    %v1179 = vsel %vm96, %v1173, %v1177
    %v1181 = vrot.slane %v1103, 7
    %v1183 = vmul.f32 %v1178, %v1181
    %v1184 = vmul.f32 %v1178, %v1179
    %1186 = vrot.lane.b32.xlu0 %v1184, 64
    %v1187 = vpop.permute.xlu0 %1186
    %v1189 = vadd.f32 %v1183, %v1187
    %v1190 = vtanh.pop %v1189
    %v1191 = vmul.f32 %v1179, %v1190
    %v1192 = vpack.c.bf16 %v1191, %v1191
    %v1194 = vshrl.u32 %v1192, 16
    %1196 = vrot.lane.b32.xlu0 %v1194, 64
    %v1197 = vpop.permute.xlu0 %1196
    %v1199 = vsel %vm155, %v1197, 0
    %1201 = vmatprep.subr.bf16.mxu0 %v1027
    %1202 = vmatpush1.bf16.msra.mxu0 %v1026
    %1203 = vmatprep.subr.bf16.mxu0 %v1029
    %1204 = vmatpush1.bf16.msra.mxu0 %v1028
    %1205 = vmatprep.subr.bf16.mxu0 %v1031
    %1206 = vmatpush1.bf16.msra.mxu0 %v1030
    %1207 = vmatprep.subr.bf16.mxu0 %v1033
    %1208 = vmatpush1.bf16.msra.mxu0 %v1032
    %1209 = vmatprep.subr.bf16.mxu0 0
    %1210 = vmatpush1.bf16.msra.mxu0 0
    %1211 = vmatprep.subr.bf16.mxu0 0
    %1212 = vmatpush1.bf16.msra.mxu0 0
    %1213 = vmatprep.subr.bf16.mxu0 0
    %1214 = vmatpush1.bf16.msra.mxu0 0
    %1215 = vmatprep.subr.bf16.mxu0 0
    %1216 = vmatpush1.bf16.msra.mxu0 0
    %1217 = vmatprep.subr.bf16.mxu0 0
    %1218 = vmatpush1.bf16.msra.mxu0 0
    %1219 = vmatprep.subr.bf16.mxu0 0
    %1220 = vmatpush1.bf16.msra.mxu0 0
    %1221 = vmatprep.subr.bf16.mxu0 0
    %1222 = vmatpush1.bf16.msra.mxu0 0
    %1223 = vmatprep.subr.bf16.mxu0 0
    %1224 = vmatpush1.bf16.msra.mxu0 0
    %1225 = vmatprep.subr.bf16.mxu0 0
    %1226 = vmatpush1.bf16.msra.mxu0 0
    %1227 = vmatprep.subr.bf16.mxu0 0
    %1228 = vmatpush1.bf16.msra.mxu0 0
    %1229 = vmatprep.subr.bf16.mxu0 0
    %1230 = vmatpush1.bf16.msra.mxu0 0
    %1231 = vmatprep.subr.bf16.mxu0 0
    %1232 = vmatpush1.bf16.msra.mxu0 0
    %1233 = vmatprep.mubr.bf16.mxu0 0
    %1234 = vmatmul.mubr.bf16.gmra.mrb[0].mxu0 %v1199
    %v1235 = vpop.f32.mrb[0].mxu0
    %v1236 = vadd.f32 0.0, %v1235
    %v1237 = vpop.f32.mrb[0].mxu0
    %v1238 = vadd.f32 0.0, %v1237
    %v1239 = vpop.f32.mrb[0].mxu0
    %v1240 = vpop.f32.mrb[0].mxu0
    %1241 = vdwg.mxu0
    %v1242 = vrot.slane %v1020, 3
    %v1243 = vrot.slane %v1022, 3
    %v1246 = vsel %vm99, %v1020, %v1242
    %v1247 = vsel %vm100, %v1022, %v1243
    %v1250 = vrot.slane %v1236, 6
    %v1251 = vrot.slane %v1238, 6
    %v1254 = vadd.f32 %v1246, %v1250
    %v1255 = vadd.f32 %v1247, %v1251
    %v1256 = vmul.f32 %v1254, 0.5
    %v1257 = vmul.f32 %v1255, 0.5
    %v1258 = vsel %vm95, %v1254, %v1256
    %v1259 = vsel %vm96, %v1255, %v1257
    %v1260 = vtanh.pop %v1258
    %v1261 = vtanh.pop %v1259
    %v1262 = vmul.f32 %v1260, 0.5
    %v1263 = vmul.f32 %v1261, 0.5
    %v1264 = vadd.f32 %v1262, 0.5
    %v1265 = vadd.f32 %v1263, 0.5
    %v1266 = vsel %vm95, %v1260, %v1264
    %v1267 = vsel %vm96, %v1261, %v1265
    %v1269 = vrot.slane %v1189, 7
    %v1271 = vmul.f32 %v1266, %v1269
    %v1272 = vmul.f32 %v1266, %v1267
    %1274 = vrot.lane.b32.xlu0 %v1272, 64
    %v1275 = vpop.permute.xlu0 %1274
    %v1277 = vadd.f32 %v1271, %v1275
    %v1278 = vtanh.pop %v1277
    %v1279 = vmul.f32 %v1267, %v1278
    %v1280 = vpack.c.bf16 %v1279, %v1279
    %v1282 = vrot.slane %v1280, 1
    %1283 = vrot.lane.b32.xlu0 %v1282, 64
    %v1284 = vpop.permute.xlu0 %1283
    %v1286 = vsel %vm155, %v1284, 0
    %1288 = vmatprep.subr.bf16.mxu0 %v1027
    %1289 = vmatpush1.bf16.msra.mxu0 %v1026
    %1290 = vmatprep.subr.bf16.mxu0 %v1029
    %1291 = vmatpush1.bf16.msra.mxu0 %v1028
    %1292 = vmatprep.subr.bf16.mxu0 %v1031
    %1293 = vmatpush1.bf16.msra.mxu0 %v1030
    %1294 = vmatprep.subr.bf16.mxu0 %v1033
    %1295 = vmatpush1.bf16.msra.mxu0 %v1032
    %1296 = vmatprep.subr.bf16.mxu0 0
    %1297 = vmatpush1.bf16.msra.mxu0 0
    %1298 = vmatprep.subr.bf16.mxu0 0
    %1299 = vmatpush1.bf16.msra.mxu0 0
    %1300 = vmatprep.subr.bf16.mxu0 0
    %1301 = vmatpush1.bf16.msra.mxu0 0
    %1302 = vmatprep.subr.bf16.mxu0 0
    %1303 = vmatpush1.bf16.msra.mxu0 0
    %1304 = vmatprep.subr.bf16.mxu0 0
    %1305 = vmatpush1.bf16.msra.mxu0 0
    %1306 = vmatprep.subr.bf16.mxu0 0
    %1307 = vmatpush1.bf16.msra.mxu0 0
    %1308 = vmatprep.subr.bf16.mxu0 0
    %1309 = vmatpush1.bf16.msra.mxu0 0
    %1310 = vmatprep.subr.bf16.mxu0 0
    %1311 = vmatpush1.bf16.msra.mxu0 0
    %1312 = vmatprep.subr.bf16.mxu0 0
    %1313 = vmatpush1.bf16.msra.mxu0 0
    %1314 = vmatprep.subr.bf16.mxu0 0
    %1315 = vmatpush1.bf16.msra.mxu0 0
    %1316 = vmatprep.subr.bf16.mxu0 0
    %1317 = vmatpush1.bf16.msra.mxu0 0
    %1318 = vmatprep.subr.bf16.mxu0 0
    %1319 = vmatpush1.bf16.msra.mxu0 0
    %1320 = vmatprep.mubr.bf16.mxu0 0
    %1321 = vmatmul.mubr.bf16.gmra.mrb[0].mxu0 %v1286
    %v1322 = vpop.f32.mrb[0].mxu0
    %v1323 = vadd.f32 0.0, %v1322
    %v1324 = vpop.f32.mrb[0].mxu0
    %v1325 = vadd.f32 0.0, %v1324
    %v1326 = vpop.f32.mrb[0].mxu0
    %v1327 = vpop.f32.mrb[0].mxu0
    %1328 = vdwg.mxu0
    %v1329 = vrot.slane %v1020, 1
    %v1330 = vrot.slane %v1022, 1
    %v1333 = vsel %vm99, %v1020, %v1329
    %v1334 = vsel %vm100, %v1022, %v1330
    %v1337 = vrot.slane %v1323, 5
    %v1338 = vrot.slane %v1325, 5
    %v1341 = vadd.f32 %v1333, %v1337
    %v1342 = vadd.f32 %v1334, %v1338
    %v1343 = vmul.f32 %v1341, 0.5
    %v1344 = vmul.f32 %v1342, 0.5
    %v1345 = vsel %vm95, %v1341, %v1343
    %v1346 = vsel %vm96, %v1342, %v1344
    %v1347 = vtanh.pop %v1345
    %v1348 = vtanh.pop %v1346
    %v1349 = vmul.f32 %v1347, 0.5
    %v1350 = vmul.f32 %v1348, 0.5
    %v1351 = vadd.f32 %v1349, 0.5
    %v1352 = vadd.f32 %v1350, 0.5
    %v1353 = vsel %vm95, %v1347, %v1351
    %v1354 = vsel %vm96, %v1348, %v1352
    %v1356 = vrot.slane %v1277, 7
    %v1358 = vmul.f32 %v1353, %v1356
    %v1359 = vmul.f32 %v1353, %v1354
    %1361 = vrot.lane.b32.xlu0 %v1359, 64
    %v1362 = vpop.permute.xlu0 %1361
    %v1364 = vadd.f32 %v1358, %v1362
    %v1365 = vtanh.pop %v1364
    %v1366 = vmul.f32 %v1354, %v1365
    %v1367 = vpack.c.bf16 %v1366, %v1366
    %v1369 = vshrl.u32 %v1367, 16
    %v1371 = vrot.slane %v1369, 1
    %1372 = vrot.lane.b32.xlu0 %v1371, 64
    %v1373 = vpop.permute.xlu0 %1372
    %v1375 = vsel %vm155, %v1373, 0
    %1377 = vmatprep.subr.bf16.mxu0 %v1027
    %1378 = vmatpush1.bf16.msra.mxu0 %v1026
    %1379 = vmatprep.subr.bf16.mxu0 %v1029
    %1380 = vmatpush1.bf16.msra.mxu0 %v1028
    %1381 = vmatprep.subr.bf16.mxu0 %v1031
    %1382 = vmatpush1.bf16.msra.mxu0 %v1030
    %1383 = vmatprep.subr.bf16.mxu0 %v1033
    %1384 = vmatpush1.bf16.msra.mxu0 %v1032
    %1385 = vmatprep.subr.bf16.mxu0 0
    %1386 = vmatpush1.bf16.msra.mxu0 0
    %1387 = vmatprep.subr.bf16.mxu0 0
    %1388 = vmatpush1.bf16.msra.mxu0 0
    %1389 = vmatprep.subr.bf16.mxu0 0
    %1390 = vmatpush1.bf16.msra.mxu0 0
    %1391 = vmatprep.subr.bf16.mxu0 0
    %1392 = vmatpush1.bf16.msra.mxu0 0
    %1393 = vmatprep.subr.bf16.mxu0 0
    %1394 = vmatpush1.bf16.msra.mxu0 0
    %1395 = vmatprep.subr.bf16.mxu0 0
    %1396 = vmatpush1.bf16.msra.mxu0 0
    %1397 = vmatprep.subr.bf16.mxu0 0
    %1398 = vmatpush1.bf16.msra.mxu0 0
    %1399 = vmatprep.subr.bf16.mxu0 0
    %1400 = vmatpush1.bf16.msra.mxu0 0
    %1401 = vmatprep.subr.bf16.mxu0 0
    %1402 = vmatpush1.bf16.msra.mxu0 0
    %1403 = vmatprep.subr.bf16.mxu0 0
    %1404 = vmatpush1.bf16.msra.mxu0 0
    %1405 = vmatprep.subr.bf16.mxu0 0
    %1406 = vmatpush1.bf16.msra.mxu0 0
    %1407 = vmatprep.subr.bf16.mxu0 0
    %1408 = vmatpush1.bf16.msra.mxu0 0
    %1409 = vmatprep.mubr.bf16.mxu0 0
    %1410 = vmatmul.mubr.bf16.gmra.mrb[0].mxu0 %v1375
    %v1411 = vpop.f32.mrb[0].mxu0
    %v1412 = vadd.f32 0.0, %v1411
    %v1413 = vpop.f32.mrb[0].mxu0
    %v1414 = vadd.f32 0.0, %v1413
    %v1415 = vpop.f32.mrb[0].mxu0
    %v1416 = vpop.f32.mrb[0].mxu0
    %1417 = vdwg.mxu0
    %v1420 = vrot.slane %v1412, 4
    %v1421 = vrot.slane %v1414, 4
    %v1424 = vadd.f32 %v1081, %v1420
    %v1425 = vadd.f32 %v1082, %v1421
    %v1426 = vmul.f32 %v1424, 0.5
    %v1427 = vmul.f32 %v1425, 0.5
    %v1428 = vsel %vm95, %v1424, %v1426
    %v1429 = vsel %vm96, %v1425, %v1427
    %v1430 = vtanh.pop %v1428
    %v1431 = vtanh.pop %v1429
    %v1432 = vmul.f32 %v1430, 0.5
    %v1433 = vmul.f32 %v1431, 0.5
    %v1434 = vadd.f32 %v1432, 0.5
    %v1435 = vadd.f32 %v1433, 0.5
    %v1436 = vsel %vm95, %v1430, %v1434
    %v1437 = vsel %vm96, %v1431, %v1435
    %v1439 = vrot.slane %v1364, 7
    %v1441 = vmul.f32 %v1436, %v1439
    %v1442 = vmul.f32 %v1436, %v1437
    %1444 = vrot.lane.b32.xlu0 %v1442, 64
    %v1445 = vpop.permute.xlu0 %1444
    %v1447 = vadd.f32 %v1441, %v1445
    %v1448 = vtanh.pop %v1447
    %v1449 = vmul.f32 %v1437, %v1448
    %v1450 = vpack.c.bf16 %v1449, %v1449
    %v1452 = vrot.slane %v1450, 2
    %1453 = vrot.lane.b32.xlu0 %v1452, 64
    %v1454 = vpop.permute.xlu0 %1453
    %v1456 = vsel %vm155, %v1454, 0
    %1458 = vmatprep.subr.bf16.mxu0 %v1027
    %1459 = vmatpush1.bf16.msra.mxu0 %v1026
    %1460 = vmatprep.subr.bf16.mxu0 %v1029
    %1461 = vmatpush1.bf16.msra.mxu0 %v1028
    %1462 = vmatprep.subr.bf16.mxu0 %v1031
    %1463 = vmatpush1.bf16.msra.mxu0 %v1030
    %1464 = vmatprep.subr.bf16.mxu0 %v1033
    %1465 = vmatpush1.bf16.msra.mxu0 %v1032
    %1466 = vmatprep.subr.bf16.mxu0 0
    %1467 = vmatpush1.bf16.msra.mxu0 0
    %1468 = vmatprep.subr.bf16.mxu0 0
    %1469 = vmatpush1.bf16.msra.mxu0 0
    %1470 = vmatprep.subr.bf16.mxu0 0
    %1471 = vmatpush1.bf16.msra.mxu0 0
    %1472 = vmatprep.subr.bf16.mxu0 0
    %1473 = vmatpush1.bf16.msra.mxu0 0
    %1474 = vmatprep.subr.bf16.mxu0 0
    %1475 = vmatpush1.bf16.msra.mxu0 0
    %1476 = vmatprep.subr.bf16.mxu0 0
    %1477 = vmatpush1.bf16.msra.mxu0 0
    %1478 = vmatprep.subr.bf16.mxu0 0
    %1479 = vmatpush1.bf16.msra.mxu0 0
    %1480 = vmatprep.subr.bf16.mxu0 0
    %1481 = vmatpush1.bf16.msra.mxu0 0
    %1482 = vmatprep.subr.bf16.mxu0 0
    %1483 = vmatpush1.bf16.msra.mxu0 0
    %1484 = vmatprep.subr.bf16.mxu0 0
    %1485 = vmatpush1.bf16.msra.mxu0 0
    %1486 = vmatprep.subr.bf16.mxu0 0
    %1487 = vmatpush1.bf16.msra.mxu0 0
    %1488 = vmatprep.subr.bf16.mxu0 0
    %1489 = vmatpush1.bf16.msra.mxu0 0
    %1490 = vmatprep.mubr.bf16.mxu0 0
    %1491 = vmatmul.mubr.bf16.gmra.mrb[0].mxu0 %v1456
    %v1492 = vpop.f32.mrb[0].mxu0
    %v1493 = vadd.f32 0.0, %v1492
    %v1494 = vpop.f32.mrb[0].mxu0
    %v1495 = vadd.f32 0.0, %v1494
    %v1496 = vpop.f32.mrb[0].mxu0
    %v1497 = vpop.f32.mrb[0].mxu0
    %1498 = vdwg.mxu0
    %v1501 = vrot.slane %v1493, 3
    %v1502 = vrot.slane %v1495, 3
    %v1505 = vadd.f32 %v1158, %v1501
    %v1506 = vadd.f32 %v1159, %v1502
    %v1507 = vmul.f32 %v1505, 0.5
    %v1508 = vmul.f32 %v1506, 0.5
    %v1509 = vsel %vm95, %v1505, %v1507
    %v1510 = vsel %vm96, %v1506, %v1508
    %v1511 = vtanh.pop %v1509
    %v1512 = vtanh.pop %v1510
    %v1513 = vmul.f32 %v1511, 0.5
    %v1514 = vmul.f32 %v1512, 0.5
    %v1515 = vadd.f32 %v1513, 0.5
    %v1516 = vadd.f32 %v1514, 0.5
    %v1517 = vsel %vm95, %v1511, %v1515
    %v1518 = vsel %vm96, %v1512, %v1516
    %v1520 = vrot.slane %v1447, 7
    %v1522 = vmul.f32 %v1517, %v1520
    %v1523 = vmul.f32 %v1517, %v1518
    %1525 = vrot.lane.b32.xlu0 %v1523, 64
    %v1526 = vpop.permute.xlu0 %1525
    %v1528 = vadd.f32 %v1522, %v1526
    %v1529 = vtanh.pop %v1528
    %v1530 = vmul.f32 %v1518, %v1529
    %v1531 = vpack.c.bf16 %v1530, %v1530
    %v1533 = vshrl.u32 %v1531, 16
    %v1535 = vrot.slane %v1533, 2
    %1536 = vrot.lane.b32.xlu0 %v1535, 64
    %v1537 = vpop.permute.xlu0 %1536
    %v1539 = vsel %vm155, %v1537, 0
    %1541 = vmatprep.subr.bf16.mxu0 %v1027
    %1542 = vmatpush1.bf16.msra.mxu0 %v1026
    %1543 = vmatprep.subr.bf16.mxu0 %v1029
    %1544 = vmatpush1.bf16.msra.mxu0 %v1028
    %1545 = vmatprep.subr.bf16.mxu0 %v1031
    %1546 = vmatpush1.bf16.msra.mxu0 %v1030
    %1547 = vmatprep.subr.bf16.mxu0 %v1033
    %1548 = vmatpush1.bf16.msra.mxu0 %v1032
    %1549 = vmatprep.subr.bf16.mxu0 0
    %1550 = vmatpush1.bf16.msra.mxu0 0
    %1551 = vmatprep.subr.bf16.mxu0 0
    %1552 = vmatpush1.bf16.msra.mxu0 0
    %1553 = vmatprep.subr.bf16.mxu0 0
    %1554 = vmatpush1.bf16.msra.mxu0 0
    %1555 = vmatprep.subr.bf16.mxu0 0
    %1556 = vmatpush1.bf16.msra.mxu0 0
    %1557 = vmatprep.subr.bf16.mxu0 0
    %1558 = vmatpush1.bf16.msra.mxu0 0
    %1559 = vmatprep.subr.bf16.mxu0 0
    %1560 = vmatpush1.bf16.msra.mxu0 0
    %1561 = vmatprep.subr.bf16.mxu0 0
    %1562 = vmatpush1.bf16.msra.mxu0 0
    %1563 = vmatprep.subr.bf16.mxu0 0
    %1564 = vmatpush1.bf16.msra.mxu0 0
    %1565 = vmatprep.subr.bf16.mxu0 0
    %1566 = vmatpush1.bf16.msra.mxu0 0
    %1567 = vmatprep.subr.bf16.mxu0 0
    %1568 = vmatpush1.bf16.msra.mxu0 0
    %1569 = vmatprep.subr.bf16.mxu0 0
    %1570 = vmatpush1.bf16.msra.mxu0 0
    %1571 = vmatprep.subr.bf16.mxu0 0
    %1572 = vmatpush1.bf16.msra.mxu0 0
    %1573 = vmatprep.mubr.bf16.mxu0 0
    %1574 = vmatmul.mubr.bf16.gmra.mrb[0].mxu0 %v1539
    %v1575 = vpop.f32.mrb[0].mxu0
    %v1576 = vadd.f32 0.0, %v1575
    %v1577 = vpop.f32.mrb[0].mxu0
    %v1578 = vadd.f32 0.0, %v1577
    %v1579 = vpop.f32.mrb[0].mxu0
    %v1580 = vpop.f32.mrb[0].mxu0
    %1581 = vdwg.mxu0
    %v1584 = vrot.slane %v1576, 2
    %v1585 = vrot.slane %v1578, 2
    %v1588 = vadd.f32 %v1246, %v1584
    %v1589 = vadd.f32 %v1247, %v1585
    %v1590 = vmul.f32 %v1588, 0.5
    %v1591 = vmul.f32 %v1589, 0.5
    %v1592 = vsel %vm95, %v1588, %v1590
    %v1593 = vsel %vm96, %v1589, %v1591
    %v1594 = vtanh.pop %v1592
    %v1595 = vtanh.pop %v1593
    %v1596 = vmul.f32 %v1594, 0.5
    %v1597 = vmul.f32 %v1595, 0.5
    %v1598 = vadd.f32 %v1596, 0.5
    %v1599 = vadd.f32 %v1597, 0.5
    %v1600 = vsel %vm95, %v1594, %v1598
    %v1601 = vsel %vm96, %v1595, %v1599
    %v1603 = vrot.slane %v1528, 7
    %v1605 = vmul.f32 %v1600, %v1603
    %v1606 = vmul.f32 %v1600, %v1601
    %1608 = vrot.lane.b32.xlu0 %v1606, 64
    %v1609 = vpop.permute.xlu0 %1608
    %v1611 = vadd.f32 %v1605, %v1609
    %v1612 = vtanh.pop %v1611
    %v1613 = vmul.f32 %v1601, %v1612
    %v1614 = vpack.c.bf16 %v1613, %v1613
    %v1616 = vrot.slane %v1614, 3
    %1617 = vrot.lane.b32.xlu0 %v1616, 64
    %v1618 = vpop.permute.xlu0 %1617
    %v1620 = vsel %vm155, %v1618, 0
    %1622 = vmatprep.subr.bf16.mxu0 %v1027
    %1623 = vmatpush1.bf16.msra.mxu0 %v1026
    %1624 = vmatprep.subr.bf16.mxu0 %v1029
    %1625 = vmatpush1.bf16.msra.mxu0 %v1028
    %1626 = vmatprep.subr.bf16.mxu0 %v1031
    %1627 = vmatpush1.bf16.msra.mxu0 %v1030
    %1628 = vmatprep.subr.bf16.mxu0 %v1033
    %1629 = vmatpush1.bf16.msra.mxu0 %v1032
    %1630 = vmatprep.subr.bf16.mxu0 0
    %1631 = vmatpush1.bf16.msra.mxu0 0
    %1632 = vmatprep.subr.bf16.mxu0 0
    %1633 = vmatpush1.bf16.msra.mxu0 0
    %1634 = vmatprep.subr.bf16.mxu0 0
    %1635 = vmatpush1.bf16.msra.mxu0 0
    %1636 = vmatprep.subr.bf16.mxu0 0
    %1637 = vmatpush1.bf16.msra.mxu0 0
    %1638 = vmatprep.subr.bf16.mxu0 0
    %1639 = vmatpush1.bf16.msra.mxu0 0
    %1640 = vmatprep.subr.bf16.mxu0 0
    %1641 = vmatpush1.bf16.msra.mxu0 0
    %1642 = vmatprep.subr.bf16.mxu0 0
    %1643 = vmatpush1.bf16.msra.mxu0 0
    %1644 = vmatprep.subr.bf16.mxu0 0
    %1645 = vmatpush1.bf16.msra.mxu0 0
    %1646 = vmatprep.subr.bf16.mxu0 0
    %1647 = vmatpush1.bf16.msra.mxu0 0
    %1648 = vmatprep.subr.bf16.mxu0 0
    %1649 = vmatpush1.bf16.msra.mxu0 0
    %1650 = vmatprep.subr.bf16.mxu0 0
    %1651 = vmatpush1.bf16.msra.mxu0 0
    %1652 = vmatprep.subr.bf16.mxu0 0
    %1653 = vmatpush1.bf16.msra.mxu0 0
    %1654 = vmatprep.mubr.bf16.mxu0 0
    %1655 = vmatmul.mubr.bf16.gmra.mrb[0].mxu0 %v1620
    %v1656 = vpop.f32.mrb[0].mxu0
    %v1657 = vadd.f32 0.0, %v1656
    %v1658 = vpop.f32.mrb[0].mxu0
    %v1659 = vadd.f32 0.0, %v1658
    %v1660 = vpop.f32.mrb[0].mxu0
    %v1661 = vpop.f32.mrb[0].mxu0
    %1662 = vdwg.mxu0
    %v1665 = vrot.slane %v1657, 1
    %v1666 = vrot.slane %v1659, 1
    %v1669 = vadd.f32 %v1333, %v1665
    %v1670 = vadd.f32 %v1334, %v1666
    %v1671 = vmul.f32 %v1669, 0.5
    %v1672 = vmul.f32 %v1670, 0.5
    %v1673 = vsel %vm95, %v1669, %v1671
    %v1674 = vsel %vm96, %v1670, %v1672
    %v1675 = vtanh.pop %v1673
    %v1676 = vtanh.pop %v1674
    %v1677 = vmul.f32 %v1675, 0.5
    %v1678 = vmul.f32 %v1676, 0.5
    %v1679 = vadd.f32 %v1677, 0.5
    %v1680 = vadd.f32 %v1678, 0.5
    %v1681 = vsel %vm95, %v1675, %v1679
    %v1682 = vsel %vm96, %v1676, %v1680
    %v1684 = vrot.slane %v1611, 7
    %v1686 = vmul.f32 %v1681, %v1684
    %v1687 = vmul.f32 %v1681, %v1682
    %1689 = vrot.lane.b32.xlu0 %v1687, 64
    %v1690 = vpop.permute.xlu0 %1689
    %v1692 = vadd.f32 %v1686, %v1690
    %v1693 = vtanh.pop %v1692
    %v1694 = vmul.f32 %v1682, %v1693
    %v1695 = vsel %vm872, %v1105, %v1191
    %v1696 = vsel %vm874, %v1695, %v1279
    %v1697 = vsel %vm876, %v1696, %v1366
    %v1698 = vsel %vm878, %v1697, %v1449
    %v1699 = vsel %vm880, %v1698, %v1530
    %v1700 = vsel %vm882, %v1699, %v1613
    %v1701 = vsel %vm884, %v1700, %v1694
    %v1703 = vrot.slane %v1694, 7
    %v1706 = vrot.slane %v1613, 5
    %v1709 = vrot.slane %v1530, 3
    %v1712 = vrot.slane %v1449, 1
    %v1715 = vrot.slane %v1366, 7
    %v1718 = vrot.slane %v1279, 5
    %v1721 = vrot.slane %v1191, 3
    %v1724 = vrot.slane %v1105, 1
    %v1726 = vsel %vm872, %v1703, %v1706
    %v1727 = vsel %vm874, %v1726, %v1709
    %v1728 = vsel %vm876, %v1727, %v1712
    %v1729 = vsel %vm878, %v1728, %v1715
    %v1730 = vsel %vm880, %v1729, %v1718
    %v1731 = vsel %vm882, %v1730, %v1721
    %v1732 = vsel %vm884, %v1731, %v1724
    %1734 = vrot.lane.b32.xlu0 %v1701, 64
    %v1735 = vpop.permute.xlu0 %1734
    %1738 = vrot.lane.b32.xlu0 %v1732, 64
    %v1739 = vpop.permute.xlu0 %1738
    %v1741 = vsel %vm917, %v1735, %v1739
    %1743 = vrot.lane.b32.xlu0 %v1741, 64
    %v1744 = vpop.permute.xlu0 %1743
    %v1746 = vsel %vm155, %v926, %v1744
    %v1747 = vpack.c.bf16 %v1746, %v1746
    %v1748 = vld [vmem:[#allocation4] sm:$0xff]
    %v1749 = vld [vmem:[#allocation4 + $0x8] sm:$0xff]
    %v1750 = vld [vmem:[#allocation4 + $0x10] sm:$0xff]
    %v1751 = vld [vmem:[#allocation4 + $0x18] sm:$0xff]
    %v1752 = vld [vmem:[#allocation4 + $0x20] sm:$0xff]
    %v1753 = vld [vmem:[#allocation4 + $0x28] sm:$0xff]
    %v1754 = vld [vmem:[#allocation4 + $0x30] sm:$0xff]
    %v1755 = vld [vmem:[#allocation4 + $0x38] sm:$0xff]
    %v1756 = vld [vmem:[#allocation4 + $0x40] sm:$0xff]
    %v1757 = vld [vmem:[#allocation4 + $0x48] sm:$0xff]
    %v1758 = vld [vmem:[#allocation4 + $0x50] sm:$0xff]
    %v1759 = vld [vmem:[#allocation4 + $0x58] sm:$0xff]
    %v1760 = vld [vmem:[#allocation4 + $0x60] sm:$0xff]
    %v1761 = vld [vmem:[#allocation4 + $0x68] sm:$0xff]
    %v1762 = vld [vmem:[#allocation4 + $0x70] sm:$0xff]
    %v1763 = vld [vmem:[#allocation4 + $0x78] sm:$0xff]
    %v1764 = vpack.c.bf16 %v1749, %v1748
    %v1765 = vpack.c.bf16 %v1751, %v1750
    %v1766 = vpack.c.bf16 %v1753, %v1752
    %v1767 = vpack.c.bf16 %v1755, %v1754
    %v1768 = vpack.c.bf16 %v1757, %v1756
    %v1769 = vpack.c.bf16 %v1759, %v1758
    %v1770 = vpack.c.bf16 %v1761, %v1760
    %v1771 = vpack.c.bf16 %v1763, %v1762
    %v1772 = vld [vmem:[%s7] sm:$0x1]
    %v1774 = vlaneseq
    %v1775 = vshrl.u32 %v1774, 7
    %v1776 = vsub.s32 0, %v1775
    %v1777 = vrot.slane %v1772, %v1776
    %1779 = vmatprep.subr.bf16.mxu0 0
    %1780 = vmatpush1.bf16.msra.mxu0 %v1764
    %1781 = vmatprep.subr.bf16.mxu0 0
    %1782 = vmatpush1.bf16.msra.mxu0 %v1765
    %1783 = vmatprep.subr.bf16.mxu0 0
    %1784 = vmatpush1.bf16.msra.mxu0 %v1766
    %1785 = vmatprep.subr.bf16.mxu0 0
    %1786 = vmatpush1.bf16.msra.mxu0 %v1767
    %1787 = vmatprep.subr.bf16.mxu0 0
    %1788 = vmatpush1.bf16.msra.mxu0 %v1768
    %1789 = vmatprep.subr.bf16.mxu0 0
    %1790 = vmatpush1.bf16.msra.mxu0 %v1769
    %1791 = vmatprep.subr.bf16.mxu0 0
    %1792 = vmatpush1.bf16.msra.mxu0 %v1770
    %1793 = vmatprep.subr.bf16.mxu0 0
    %1794 = vmatpush1.bf16.msra.mxu0 %v1771
    %1795 = vmatprep.subr.bf16.mxu0 0
    %1796 = vmatpush1.bf16.msra.mxu0 0
    %1797 = vmatprep.subr.bf16.mxu0 0
    %1798 = vmatpush1.bf16.msra.mxu0 0
    %1799 = vmatprep.subr.bf16.mxu0 0
    %1800 = vmatpush1.bf16.msra.mxu0 0
    %1801 = vmatprep.subr.bf16.mxu0 0
    %1802 = vmatpush1.bf16.msra.mxu0 0
    %1803 = vmatprep.subr.bf16.mxu0 0
    %1804 = vmatpush1.bf16.msra.mxu0 0
    %1805 = vmatprep.subr.bf16.mxu0 0
    %1806 = vmatpush1.bf16.msra.mxu0 0
    %1807 = vmatprep.subr.bf16.mxu0 0
    %1808 = vmatpush1.bf16.msra.mxu0 0
    %1809 = vmatprep.subr.bf16.mxu0 0
    %1810 = vmatpush1.bf16.msra.mxu0 0
    %1811 = vmatprep.mubr.bf16.mxu0 0
    %1812 = vmatmul.mubr.bf16.gmra.mrb[0].mxu0 %v1747
    %v1813 = vpop.f32.mrb[0].mxu0
    %v1814 = vadd.f32 %v1777, %v1813
    %v1815 = vpop.f32.mrb[0].mxu0
    %v1816 = vpop.f32.mrb[0].mxu0
    %v1817 = vpop.f32.mrb[0].mxu0
    %1818 = vdwg.mxu0
    %v1819 = vxor.u32 %v1814, 2147483648
    %v1820 = vmul.f32 %v1819, 1.442695
    %v1821 = vpow.pop %v1820
    %v1822 = vadd.f32 %v1821, 1.0
    %v1823 = vrcp.pop %v1822
    %v1824 = vmul.f32 1.0, %v1823
    %v1825 = vmul.f32 %v1814, %v1824
    %v1826 = vadd.f32 %v926, %v1741
    %v1827 = vadd.f32 %v1826, %v1825
    %1829 = vrot.lane.b32.xlu0 %v1825, 64
    %v1830 = vpop.permute.xlu0 %1829
    %v1832 = vadd.f32 %v1827, %v1830
    %v1833 = vld [vmem:[%s12] sm:$0x1]
    %v1834 = vld [vmem:[%s10] sm:$0xff]
    %v1835 = vld [vmem:[%s10 + $0x8] sm:$0xff]
    %v1836 = vld [vmem:[%s10 + $0x10] sm:$0xff]
    %v1837 = vld [vmem:[%s10 + $0x18] sm:$0xff]
    %v1838 = vld [vmem:[%s10 + $0x20] sm:$0xff]
    %v1839 = vld [vmem:[%s10 + $0x28] sm:$0xff]
    %v1840 = vld [vmem:[%s10 + $0x30] sm:$0xff]
    %v1841 = vld [vmem:[%s10 + $0x38] sm:$0xff]
    %v1843 = vlaneseq
    %v1844 = vshrl.u32 %v1843, 7
    %v1845 = vsub.s32 0, %v1844
    %v1846 = vrot.slane %v1833, %v1845
    %v1849 = vsel %vm155, %v1832, 0
    %1851 = vmatprep.subr.mxu0 0.0
    %1852 = vmatpush1.msra.mxu0 %v1834
    %1853 = vmatprep.subr.mxu0 0.0
    %1854 = vmatpush1.msra.mxu0 %v1835
    %1855 = vmatprep.subr.mxu0 0.0
    %1856 = vmatpush1.msra.mxu0 %v1836
    %1857 = vmatprep.subr.mxu0 0.0
    %1858 = vmatpush1.msra.mxu0 %v1837
    %1859 = vmatprep.subr.mxu0 0.0
    %1860 = vmatpush1.msra.mxu0 %v1838
    %1861 = vmatprep.subr.mxu0 0.0
    %1862 = vmatpush1.msra.mxu0 %v1839
    %1863 = vmatprep.subr.mxu0 0.0
    %1864 = vmatpush1.msra.mxu0 %v1840
    %1865 = vmatprep.subr.mxu0 0.0
    %1866 = vmatpush1.msra.mxu0 %v1841
    %1867 = vmatprep.subr.mxu0 0.0
    %1868 = vmatpush1.msra.mxu0 0.0
    %1869 = vmatprep.subr.mxu0 0.0
    %1870 = vmatpush1.msra.mxu0 0.0
    %1871 = vmatprep.subr.mxu0 0.0
    %1872 = vmatpush1.msra.mxu0 0.0
    %1873 = vmatprep.subr.mxu0 0.0
    %1874 = vmatpush1.msra.mxu0 0.0
    %1875 = vmatprep.subr.mxu0 0.0
    %1876 = vmatpush1.msra.mxu0 0.0
    %1877 = vmatprep.subr.mxu0 0.0
    %1878 = vmatpush1.msra.mxu0 0.0
    %1879 = vmatprep.subr.mxu0 0.0
    %1880 = vmatpush1.msra.mxu0 0.0
    %1881 = vmatprep.subr.mxu0 0.0
    %1882 = vmatpush1.msra.mxu0 0.0
    %1883 = vmatprep.subr.mxu0 0.0
    %1884 = vmatpush1.msra.mxu0 0.0
    %1885 = vmatprep.subr.mxu0 0.0
    %1886 = vmatpush1.msra.mxu0 0.0
    %1887 = vmatprep.subr.mxu0 0.0
    %1888 = vmatpush1.msra.mxu0 0.0
    %1889 = vmatprep.subr.mxu0 0.0
    %1890 = vmatpush1.msra.mxu0 0.0
    %1891 = vmatprep.subr.mxu0 0.0
    %1892 = vmatpush1.msra.mxu0 0.0
    %1893 = vmatprep.subr.mxu0 0.0
    %1894 = vmatpush1.msra.mxu0 0.0
    %1895 = vmatprep.subr.mxu0 0.0
    %1896 = vmatpush1.msra.mxu0 0.0
    %1897 = vmatprep.subr.mxu0 0.0
    %1898 = vmatpush1.msra.mxu0 0.0
    %1899 = vmatprep.subr.mxu0 0.0
    %1900 = vmatpush1.msra.mxu0 0.0
    %1901 = vmatprep.subr.mxu0 0.0
    %1902 = vmatpush1.msra.mxu0 0.0
    %1903 = vmatprep.subr.mxu0 0.0
    %1904 = vmatpush1.msra.mxu0 0.0
    %1905 = vmatprep.subr.mxu0 0.0
    %1906 = vmatpush1.msra.mxu0 0.0
    %1907 = vmatprep.subr.mxu0 0.0
    %1908 = vmatpush1.msra.mxu0 0.0
    %1909 = vmatprep.subr.mxu0 0.0
    %1910 = vmatpush1.msra.mxu0 0.0
    %1911 = vmatprep.subr.mxu0 0.0
    %1912 = vmatpush1.msra.mxu0 0.0
    %1913 = vmatprep.subr.mxu0 0.0
    %1914 = vmatpush1.msra.mxu0 0.0
    %1915 = vmatprep.mubr.f32.mxu0 0.0
    %1916 = vmatmul.mubr.f32.gmra.mrb[0].mxu0 %v1849
    %v1917 = vpop.f32.mrb[0].mxu0
    %v1918 = vadd.f32 %v1846, %v1917
    %v1919 = vpop.f32.mrb[0].mxu0
    %1920 = vdwg.mxu0
    %vm1921 = vcmask 7168
    %1922 = vst.msk [vmem:[%s13] sm:$0xff] %vm1921, %v1918
    %v1923 = vsel %vm155, %v1832, 0.0
    %v1924 = vrot.slane %v1923, 4
    %v1925 = vadd.f32 %v1923, %v1924
    %v1926 = vrot.slane %v1925, 2
    %v1927 = vadd.f32 %v1925, %v1926
    %v1928 = vrot.slane %v1927, 1
    %v1929 = vadd.f32 %v1927, %v1928
    %v1930 = vrcp.pop 8.0
    %v1931 = vmul.f32 %v1929, %v1930
    %v1932 = vld [vmem:[%s1] sm:$0x1]
    %v1933 = vld [vmem:[#allocation6] sm:$0xff]
    %v1934 = vld [vmem:[#allocation6 + $0x8] sm:$0xff]
    %v1935 = vld [vmem:[#allocation6 + $0x10] sm:$0xff]
    %v1936 = vld [vmem:[#allocation6 + $0x18] sm:$0xff]
    %v1937 = vld [vmem:[#allocation6 + $0x20] sm:$0xff]
    %v1938 = vld [vmem:[#allocation6 + $0x28] sm:$0xff]
    %v1939 = vld [vmem:[#allocation6 + $0x30] sm:$0xff]
    %v1940 = vld [vmem:[#allocation6 + $0x38] sm:$0xff]
    %v1941 = vld [vmem:[#allocation6 + $0x40] sm:$0xff]
    %v1942 = vld [vmem:[#allocation6 + $0x48] sm:$0xff]
    %v1943 = vld [vmem:[#allocation6 + $0x50] sm:$0xff]
    %v1944 = vld [vmem:[#allocation6 + $0x58] sm:$0xff]
    %v1945 = vld [vmem:[#allocation6 + $0x60] sm:$0xff]
    %v1946 = vld [vmem:[#allocation6 + $0x68] sm:$0xff]
    %v1947 = vld [vmem:[#allocation6 + $0x70] sm:$0xff]
    %v1948 = vld [vmem:[#allocation6 + $0x78] sm:$0xff]
    %v1949 = vld [vmem:[%s9] sm:$0x1]
    %1950 = vmatprep.subr.mxu0 0.0
    %1951 = vmatpush1.msra.mxu0 %v1933
    %1952 = vmatprep.subr.mxu0 0.0
    %1953 = vmatpush1.msra.mxu0 %v1934
    %1954 = vmatprep.subr.mxu0 0.0
    %1955 = vmatpush1.msra.mxu0 %v1935
    %1956 = vmatprep.subr.mxu0 0.0
    %1957 = vmatpush1.msra.mxu0 %v1936
    %1958 = vmatprep.subr.mxu0 0.0
    %1959 = vmatpush1.msra.mxu0 %v1937
    %1960 = vmatprep.subr.mxu0 0.0
    %1961 = vmatpush1.msra.mxu0 %v1938
    %1962 = vmatprep.subr.mxu0 0.0
    %1963 = vmatpush1.msra.mxu0 %v1939
    %1964 = vmatprep.subr.mxu0 0.0
    %1965 = vmatpush1.msra.mxu0 %v1940
    %1966 = vmatprep.subr.mxu0 0.0
    %1967 = vmatpush1.msra.mxu0 %v1941
    %1968 = vmatprep.subr.mxu0 0.0
    %1969 = vmatpush1.msra.mxu0 %v1942
    %1970 = vmatprep.subr.mxu0 0.0
    %1971 = vmatpush1.msra.mxu0 %v1943
    %1972 = vmatprep.subr.mxu0 0.0
    %1973 = vmatpush1.msra.mxu0 %v1944
    %1974 = vmatprep.subr.mxu0 0.0
    %1975 = vmatpush1.msra.mxu0 %v1945
    %1976 = vmatprep.subr.mxu0 0.0
    %1977 = vmatpush1.msra.mxu0 %v1946
    %1978 = vmatprep.subr.mxu0 0.0
    %1979 = vmatpush1.msra.mxu0 %v1947
    %1980 = vmatprep.subr.mxu0 0.0
    %1981 = vmatpush1.msra.mxu0 %v1948
    %1982 = vmatprep.subr.mxu0 0.0
    %1983 = vmatpush1.msra.mxu0 0.0
    %1984 = vmatprep.subr.mxu0 0.0
    %1985 = vmatpush1.msra.mxu0 0.0
    %1986 = vmatprep.subr.mxu0 0.0
    %1987 = vmatpush1.msra.mxu0 0.0
    %1988 = vmatprep.subr.mxu0 0.0
    %1989 = vmatpush1.msra.mxu0 0.0
    %1990 = vmatprep.subr.mxu0 0.0
    %1991 = vmatpush1.msra.mxu0 0.0
    %1992 = vmatprep.subr.mxu0 0.0
    %1993 = vmatpush1.msra.mxu0 0.0
    %1994 = vmatprep.subr.mxu0 0.0
    %1995 = vmatpush1.msra.mxu0 0.0
    %1996 = vmatprep.subr.mxu0 0.0
    %1997 = vmatpush1.msra.mxu0 0.0
    %1998 = vmatprep.subr.mxu0 0.0
    %1999 = vmatpush1.msra.mxu0 0.0
    %2000 = vmatprep.subr.mxu0 0.0
    %2001 = vmatpush1.msra.mxu0 0.0
    %2002 = vmatprep.subr.mxu0 0.0
    %2003 = vmatpush1.msra.mxu0 0.0
    %2004 = vmatprep.subr.mxu0 0.0
    %2005 = vmatpush1.msra.mxu0 0.0
    %2006 = vmatprep.subr.mxu0 0.0
    %2007 = vmatpush1.msra.mxu0 0.0
    %2008 = vmatprep.subr.mxu0 0.0
    %2009 = vmatpush1.msra.mxu0 0.0
    %2010 = vmatprep.subr.mxu0 0.0
    %2011 = vmatpush1.msra.mxu0 0.0
    %2012 = vmatprep.subr.mxu0 0.0
    %2013 = vmatpush1.msra.mxu0 0.0
    %2014 = vmatprep.mubr.f32.mxu0 0.0
    %2015 = vmatmul.mubr.f32.gmra.mrb[0].mxu0 %v1932
    %v2016 = vpop.f32.mrb[0].mxu0
    %v2017 = vadd.f32 %v1949, %v2016
    %v2018 = vpop.f32.mrb[0].mxu0
    %2019 = vdwg.mxu0
    %v2020 = vxor.u32 %v2017, 2147483648
    %v2021 = vmul.f32 %v2020, 1.442695
    %v2022 = vpow.pop %v2021
    %v2023 = vadd.f32 %v2022, 1.0
    %v2024 = vrcp.pop %v2023
    %v2025 = vmul.f32 1.0, %v2024
    %v2026 = vmul.f32 %v2017, %v2025
    %v2027 = vadd.f32 %v1932, %v2026
    %v2029 = vlaneseq
    %v2030 = vshrl.u32 %v2029, 7
    %v2031 = vsub.s32 0, %v2030
    %v2032 = vrot.slane %v2027, %v2031
    %2033 = vrot.lane.b32.xlu0 %v2032, 64
    %v2034 = vpop.permute.xlu0 %2033
    %v2036 = vsel %vm155, %v1931, %v2034
    %v2037 = vsel %vm155, %v1931, %v2027
    %v2038 = vld [vmem:[%s11] sm:$0xff]
    %v2039 = vld [vmem:[%s11 + $0x8] sm:$0xff]
    %v2040 = vld [vmem:[%s11 + $0x10] sm:$0xff]
    %v2041 = vld [vmem:[%s11 + $0x18] sm:$0xff]
    %v2042 = vld [vmem:[%s11 + $0x20] sm:$0xff]
    %v2043 = vld [vmem:[%s11 + $0x28] sm:$0xff]
    %v2044 = vld [vmem:[%s11 + $0x30] sm:$0xff]
    %v2045 = vld [vmem:[%s11 + $0x38] sm:$0xff]
    %v2046 = vld [vmem:[%s11 + $0x40] sm:$0xff]
    %v2047 = vld [vmem:[%s11 + $0x48] sm:$0xff]
    %v2048 = vld [vmem:[%s11 + $0x50] sm:$0xff]
    %v2049 = vld [vmem:[%s11 + $0x58] sm:$0xff]
    %v2050 = vld [vmem:[%s11 + $0x60] sm:$0xff]
    %v2051 = vld [vmem:[%s11 + $0x68] sm:$0xff]
    %v2052 = vld [vmem:[%s11 + $0x70] sm:$0xff]
    %v2053 = vld [vmem:[%s11 + $0x78] sm:$0xff]
    %v2054 = vld [vmem:[%s11 + $0x80] sm:$0xff]
    %v2055 = vld [vmem:[%s11 + $0x88] sm:$0xff]
    %v2056 = vld [vmem:[%s11 + $0x90] sm:$0xff]
    %v2057 = vld [vmem:[%s11 + $0x98] sm:$0xff]
    %v2058 = vld [vmem:[%s11 + $0xa0] sm:$0xff]
    %v2059 = vld [vmem:[%s11 + $0xa8] sm:$0xff]
    %v2060 = vld [vmem:[%s11 + $0xb0] sm:$0xff]
    %v2061 = vld [vmem:[%s11 + $0xb8] sm:$0xff]
    %v2062 = vld [vmem:[%s11 + $0xc0] sm:$0xff]
    %v2063 = vld [vmem:[%s11 + $0xc8] sm:$0xff]
    %v2064 = vld [vmem:[%s11 + $0xd0] sm:$0xff]
    %v2065 = vld [vmem:[%s11 + $0xd8] sm:$0xff]
    %v2066 = vld [vmem:[%s11 + $0xe0] sm:$0xff]
    %v2067 = vld [vmem:[%s11 + $0xe8] sm:$0xff]
    %v2068 = vld [vmem:[%s11 + $0xf0] sm:$0xff]
    %v2069 = vld [vmem:[%s11 + $0xf8] sm:$0xff]
    %2070 = vrot.lane.b32.xlu0 %v1846, 127
    %v2071 = vpop.permute.xlu0 %2070
    %2073 = vmatprep.subr.mxu0 0.0
    %2074 = vmatpush1.msra.mxu0 %v2038
    %2075 = vmatprep.subr.mxu0 0.0
    %2076 = vmatpush1.msra.mxu0 %v2039
    %2077 = vmatprep.subr.mxu0 0.0
    %2078 = vmatpush1.msra.mxu0 %v2040
    %2079 = vmatprep.subr.mxu0 0.0
    %2080 = vmatpush1.msra.mxu0 %v2041
    %2081 = vmatprep.subr.mxu0 0.0
    %2082 = vmatpush1.msra.mxu0 %v2042
    %2083 = vmatprep.subr.mxu0 0.0
    %2084 = vmatpush1.msra.mxu0 %v2043
    %2085 = vmatprep.subr.mxu0 0.0
    %2086 = vmatpush1.msra.mxu0 %v2044
    %2087 = vmatprep.subr.mxu0 0.0
    %2088 = vmatpush1.msra.mxu0 %v2045
    %2089 = vmatprep.subr.mxu0 0.0
    %2090 = vmatpush1.msra.mxu0 %v2046
    %2091 = vmatprep.subr.mxu0 0.0
    %2092 = vmatpush1.msra.mxu0 %v2047
    %2093 = vmatprep.subr.mxu0 0.0
    %2094 = vmatpush1.msra.mxu0 %v2048
    %2095 = vmatprep.subr.mxu0 0.0
    %2096 = vmatpush1.msra.mxu0 %v2049
    %2097 = vmatprep.subr.mxu0 0.0
    %2098 = vmatpush1.msra.mxu0 %v2050
    %2099 = vmatprep.subr.mxu0 0.0
    %2100 = vmatpush1.msra.mxu0 %v2051
    %2101 = vmatprep.subr.mxu0 0.0
    %2102 = vmatpush1.msra.mxu0 %v2052
    %2103 = vmatprep.subr.mxu0 0.0
    %2104 = vmatpush1.msra.mxu0 %v2053
    %2105 = vmatprep.subr.mxu0 0.0
    %2106 = vmatpush1.msra.mxu0 %v2054
    %2107 = vmatprep.subr.mxu0 0.0
    %2108 = vmatpush1.msra.mxu0 %v2055
    %2109 = vmatprep.subr.mxu0 0.0
    %2110 = vmatpush1.msra.mxu0 %v2056
    %2111 = vmatprep.subr.mxu0 0.0
    %2112 = vmatpush1.msra.mxu0 %v2057
    %2113 = vmatprep.subr.mxu0 0.0
    %2114 = vmatpush1.msra.mxu0 %v2058
    %2115 = vmatprep.subr.mxu0 0.0
    %2116 = vmatpush1.msra.mxu0 %v2059
    %2117 = vmatprep.subr.mxu0 0.0
    %2118 = vmatpush1.msra.mxu0 %v2060
    %2119 = vmatprep.subr.mxu0 0.0
    %2120 = vmatpush1.msra.mxu0 %v2061
    %2121 = vmatprep.subr.mxu0 0.0
    %2122 = vmatpush1.msra.mxu0 %v2062
    %2123 = vmatprep.subr.mxu0 0.0
    %2124 = vmatpush1.msra.mxu0 %v2063
    %2125 = vmatprep.subr.mxu0 0.0
    %2126 = vmatpush1.msra.mxu0 %v2064
    %2127 = vmatprep.subr.mxu0 0.0
    %2128 = vmatpush1.msra.mxu0 %v2065
    %2129 = vmatprep.subr.mxu0 0.0
    %2130 = vmatpush1.msra.mxu0 %v2066
    %2131 = vmatprep.subr.mxu0 0.0
    %2132 = vmatpush1.msra.mxu0 %v2067
    %2133 = vmatprep.subr.mxu0 0.0
    %2134 = vmatpush1.msra.mxu0 %v2068
    %2135 = vmatprep.subr.mxu0 0.0
    %2136 = vmatpush1.msra.mxu0 %v2069
    %2137 = vmatprep.mubr.f32.mxu0 %v2037
    %2138 = vmatmul.mubr.f32.gmra.mrb[0].mxu0 %v2036
    %v2139 = vpop.f32.mrb[0].mxu0
    %v2140 = vadd.f32 %v2071, %v2139
    %v2141 = vpop.f32.mrb[0].mxu0
    %2142 = vdwg.mxu0
    %vm2143 = vcmask 98304
    %2144 = vst.msk [vmem:[%s14] sm:$0x1] %vm2143, %v2140
    // Predicated region
    $region66: #{neural_net_forward.1} parent=1 // pred_check
      _
    $region67: #{neural_net_forward.1} parent=1 // pred_check_branch
      %2146 = sbr.rel (0) target = $region69
    $region68: #{neural_net_forward.1} parent=1 // pred_region
      _
    $region69: #{neural_net_forward.1} parent=1 // pred_fallthru
      _
    // Predicated region
    $region70: #{neural_net_forward.1} parent=1 // pred_check
      _
    $region71: #{neural_net_forward.1} parent=1 // pred_check_branch
      %2148 = sbr.rel (0) target = $region73
    $region72: #{neural_net_forward.1} parent=1 // pred_region
      _
    $region73: #{neural_net_forward.1} parent=1 // pred_fallthru
      _
    // Predicated region
    $region74: #{neural_net_forward.1} parent=1 // pred_check
      _
    $region75: #{neural_net_forward.1} parent=1 // pred_check_branch
      %2150 = sbr.rel (0) target = $region77
    $region76: #{neural_net_forward.1} parent=1 // pred_region
      _
    $region77: #{neural_net_forward.1} parent=1 // pred_fallthru
      _
    // Predicated region
    $region78: #{neural_net_forward.1} parent=1 // pred_check
      _
    $region79: #{neural_net_forward.1} parent=1 // pred_check_branch
      %2152 = sbr.rel (0) target = $region81
    $region80: #{neural_net_forward.1} parent=1 // pred_region
      _
    $region81: #{neural_net_forward.1} parent=1 // pred_fallthru
      _
    %2153 = vsyncpa [#allocation3], 1
    %2154 = vsyncpa [#allocation5], 1

</llo_original>
